<compile_context>
chip_gen: v7x
topology: tpu7x:2x2x1
jax: 0.10.0
libtpu: 0.0.40
codegen_flags: <defaults>
</compile_context>

<pallas_src>
import math

import jax
import jax.numpy as jnp
from jax import lax
from jax.experimental import pallas as pl
from jax.experimental.pallas import tpu as pltpu

KS = (3, 5, 7)               # SpatialAttention kernel sizes
KMAX = 7
PAD = KMAX // 2              # all branch kernels zero-embedded into 7x7
HID = 16                     # hidden channels of each branch's first conv
NB = len(KS)                 # number of branches
NTAPS = KMAX * KMAX          # 49 taps
PROWS = 2 * NTAPS + 1        # 98 tap rows (2 channels x 49) + 1 bias-ones row
EPS = 1e-5                   # PyTorch BatchNorm2d default eps


def _eca_kernel_size(channels, gamma=2, b=1):
    t = int(abs((math.log(channels, 2) + b) / gamma))
    return t if t % 2 else t + 1


# ------------------------------ Pallas kernel ------------------------------ #
def _make_kernel(C, H, W, bt, k_eca):
    HW = H * W
    N = bt * HW

    def kernel(x_ref, w1t_ref, mask_ref, w2t_ref, b2_ref, wc_ref, ew_ref,
               o_ref, patch_ref):
        # x_ref   : (C, N)        batch-tile of inputs, pixels in lanes
        # w1t_ref : (48, 99)      fused/zero-embedded first convs (+BN scale,
        #                         last column = folded bias)
        # mask_ref: (99, N)       per-tap boundary masks (+ ones row)
        # w2t_ref : (3, 48)       block-diagonal 1x1 convs (BN2 scale folded)
        # b2_ref  : (3,)   SMEM   folded conv2 bias + BN2
        # wc_ref  : (3,)   SMEM   softmax(fusion_weights)
        # ew_ref  : (k,)   SMEM   ECA conv1d weight
        # o_ref   : (C, N)        output
        # patch_ref: (99, N) VMEM im2col scratch
        x = x_ref[...].astype(jnp.float32)                      # (C, N)

        # ------------------------- ECA attention ------------------------- #
        epad = k_eca // 2
        segs = []
        for b in range(bt):                                      # per image
            seg = x[:, b * HW:(b + 1) * HW]                      # (C, HW)
            gap = jnp.mean(seg, axis=-1, keepdims=True)          # (C, 1) GAP
            if epad > 0:
                z = jnp.zeros((epad, 1), jnp.float32)
                gp = jnp.concatenate([z, gap, z], axis=0)
            else:
                gp = gap
            conv = jnp.zeros((C, 1), jnp.float32)
            for j in range(k_eca):                               # conv1d over C
                conv = conv + ew_ref[j] * gp[j:j + C, :]
            segs.append(seg * jax.nn.sigmoid(conv))              # x * eca scale
        xe = segs[0] if bt == 1 else jnp.concatenate(segs, axis=1)   # (C, N)

        # ---------- channel mean / max: leading-axis VPU reduction ---------- #
        csum = xe[0:1, :]
        cmax = xe[0:1, :]
        for c in range(1, C):
            row = xe[c:c + 1, :]
            csum = csum + row
            cmax = jnp.maximum(cmax, row)
        att2 = jnp.concatenate([csum * (1.0 / C), cmax], axis=0)     # (2, N)

        # -------- im2col: 49 lane-shifted copies of the [avg,max] planes ---- #
        # doubled[q] == att2[q mod N]; a static lane slice at offset
        # (off mod N) is a roll of att2 by `off` without per-tap reshapes.
        doubled = jnp.concatenate([att2, att2], axis=1)              # (2, 2N)
        for dy in range(KMAX):
            for dx in range(KMAX):
                t = dy * KMAX + dx
                off = (dy - PAD) * W + (dx - PAD)
                st = off % N
                patch_ref[2 * t:2 * t + 2, :] = doubled[:, st:st + N]
        patch_ref[2 * NTAPS:2 * NTAPS + 1, :] = jnp.ones((1, N), jnp.float32)

        # out-of-image (and cross-image) taps zeroed -> "same" zero padding
        patch = patch_ref[...] * mask_ref[...]                       # (99, N)

        # -------- all three first convs (+bias+BN) in ONE K=99 matmul ------- #
        hidden = jnp.dot(w1t_ref[...], patch,
                         preferred_element_type=jnp.float32)         # (48, N)
        hidden = jnp.maximum(hidden, 0.0)                            # ReLU

        # ---------------- block-diagonal 1x1 convs (BN folded) -------------- #
        logits = jnp.dot(w2t_ref[...], hidden,
                         preferred_element_type=jnp.float32)         # (3, N)

        combined = jnp.zeros((1, N), jnp.float32)
        for m in range(NB):                                          # sigmoid +
            combined = combined + wc_ref[m] * jax.nn.sigmoid(        # weighted
                logits[m:m + 1, :] + b2_ref[m])                      # fusion

        # SpatialAttention residual:  xe * combined + xe
        o_ref[...] = (xe * (combined + 1.0)).astype(o_ref.dtype)

    return kernel


# -------------------------------- parameters ------------------------------- #
def init_params(key, channels):
    kb, ke = jax.random.split(key)
    branches = []
    for ks in KS:
        kb, *pk = jax.random.split(kb, 13)
        it = iter(pk)
        branches.append(dict(
            ks=ks,
            # Conv2d(2, 16, ks, padding=ks//2)
            w1=0.2 * jax.random.normal(next(it), (HID, 2, ks, ks), jnp.float32),
            b1=0.1 * jax.random.normal(next(it), (HID,), jnp.float32),
            # BatchNorm2d(16) (eval-mode synthetic stats)
            g1=1.0 + 0.1 * jax.random.normal(next(it), (HID,), jnp.float32),
            be1=0.1 * jax.random.normal(next(it), (HID,), jnp.float32),
            m1=0.1 * jax.random.normal(next(it), (HID,), jnp.float32),
            v1=0.5 + jnp.abs(jax.random.normal(next(it), (HID,), jnp.float32)),
            # Conv2d(16, 1, 1)
            w2=0.2 * jax.random.normal(next(it), (1, HID, 1, 1), jnp.float32),
            b2=0.1 * jax.random.normal(next(it), (1,), jnp.float32),
            # BatchNorm2d(1)
            g2=1.0 + 0.1 * jax.random.normal(next(it), (1,), jnp.float32),
            be2=0.1 * jax.random.normal(next(it), (1,), jnp.float32),
            m2=0.1 * jax.random.normal(next(it), (1,), jnp.float32),
            v2=0.5 + jnp.abs(jax.random.normal(next(it), (1,), jnp.float32)),
        ))
    fusion_weights = jnp.ones((NB,), jnp.float32)
    k_eca = _eca_kernel_size(channels)
    eca_w = 0.5 * jax.random.normal(ke, (k_eca,), jnp.float32)  # Conv1d(1,1,k)
    return dict(branches=branches, fusion_weights=fusion_weights, eca_w=eca_w)


def pack_spa_params(branches, fusion_weights):
    """Fold BN into the weights; fuse the 3 branches into single tensors."""
    w1t = jnp.zeros((NB * HID, PROWS), jnp.float32)          # (48, 99)
    w2t = jnp.zeros((NB, NB * HID), jnp.float32)             # (3, 48)
    b2 = jnp.zeros((NB,), jnp.float32)
    for mi, p in enumerate(branches):
        ks = p["ks"]
        off = (KMAX - ks) // 2
        s1 = p["g1"] / jnp.sqrt(p["v1"] + EPS)                # BN1 scale
        b1 = p["be1"] + s1 * (p["b1"] - p["m1"])              # conv1 bias+BN1
        w_emb = jnp.zeros((HID, 2, KMAX, KMAX), jnp.float32)  # zero-embed 7x7
        w_emb = w_emb.at[:, :, off:off + ks, off:off + ks].set(p["w1"])
        w_emb = w_emb * s1[:, None, None, None]               # fold BN1 scale
        # column layout matches patch rows: col = 2*(dy*7+dx) + channel
        w_cols = jnp.transpose(w_emb, (0, 2, 3, 1)).reshape(HID, 2 * NTAPS)
        w1t = w1t.at[mi * HID:(mi + 1) * HID, :2 * NTAPS].set(w_cols)
        w1t = w1t.at[mi * HID:(mi + 1) * HID, 2 * NTAPS].set(b1)
        s2 = p["g2"][0] / jnp.sqrt(p["v2"][0] + EPS)
        w2t = w2t.at[mi, mi * HID:(mi + 1) * HID].set(p["w2"][0, :, 0, 0] * s2)
        b2 = b2.at[mi].set(p["be2"][0] + s2 * (p["b2"][0] - p["m2"][0]))
    wc = jax.nn.softmax(fusion_weights)                       # (3,)
    return w1t, w2t, b2, wc


def build_masks(H, W, bt):
    """(99, bt*H*W) per-tap in-bounds masks (last row = ones for the bias)."""
    HW = H * W
    ys = jnp.repeat(jnp.arange(H), W)
    xs = jnp.tile(jnp.arange(W), H)
    rows = []
    for dy in range(KMAX):
        for dx in range(KMAX):
            ry, rx = dy - PAD, dx - PAD
            ok = ((ys + ry >= 0) & (ys + ry < H) &
                  (xs + rx >= 0) & (xs + rx < W)).astype(jnp.float32)
            rows.append(ok)      # avg channel
            rows.append(ok)      # max channel
    rows.append(jnp.ones((HW,), jnp.float32))
    msk = jnp.stack(rows, axis=0)                             # (99, HW)
    if bt > 1:
        msk = jnp.tile(msk, (1, bt))
    return msk


def _pick_bt(B, HW, C):
    """Largest batch tile that divides B, keeps >=2 grid steps (so the
    "parallel" batch axis can use both v7x TensorCores) and stays far inside
    v7x's 64 MiB VMEM."""
    byte_budget = 4 << 20
    best = 1
    for d in range(1, B + 1):
        if B % d:
            continue
        if B >= 2 and B // d < 2:
            continue
        if d * HW * 4 * (2 * PROWS + 2 * C + 8) > byte_budget:
            continue
        best = d
    return best


# ---------------------------------- wrapper -------------------------------- #
def combined_attention(x_nchw, params):
    """CombinedAttentionBlock forward: ECAAttention followed by SpatialAttention."""
    B, C, H, W = x_nchw.shape
    HW = H * W
    bt = _pick_bt(B, HW, C)
    N = bt * HW
    n_steps = B // bt

    w1t, w2t, b2, wc = pack_spa_params(params["branches"],
                                       params["fusion_weights"])
    eca_w = params["eca_w"]
    masks = build_masks(H, W, bt)

    # lane-dense layout: channels -> sublanes, (batch*H*W) -> lanes
    x2d = jnp.transpose(x_nchw, (1, 0, 2, 3)).reshape(C, B * HW)

    kernel = _make_kernel(C, H, W, bt, int(eca_w.shape[0]))

    out2d = pl.pallas_call(
        kernel,
        out_shape=jax.ShapeDtypeStruct((C, B * HW), x_nchw.dtype),
        grid_spec=pltpu.PrefetchScalarGridSpec(
            num_scalar_prefetch=0,
            grid=(n_steps,),
            in_specs=[
                pl.BlockSpec((C, N), lambda i: (0, i)),
                pl.BlockSpec((NB * HID, PROWS), lambda i: (0, 0)),
                pl.BlockSpec((PROWS, N), lambda i: (0, 0)),
                pl.BlockSpec((NB, NB * HID), lambda i: (0, 0)),
                pl.BlockSpec(memory_space=pltpu.MemorySpace.SMEM),   # b2
                pl.BlockSpec(memory_space=pltpu.MemorySpace.SMEM),   # wc
                pl.BlockSpec(memory_space=pltpu.MemorySpace.SMEM),   # eca_w
            ],
            out_specs=pl.BlockSpec((C, N), lambda i: (0, i)),
            scratch_shapes=[pltpu.VMEM((PROWS, N), jnp.float32)],
        ),
        compiler_params=pltpu.CompilerParams(
            dimension_semantics=("parallel",)),
    )(x2d, w1t, masks, w2t, b2, wc, eca_w)

    return jnp.transpose(out2d.reshape(C, B, H, W), (1, 0, 2, 3))


# ---------------------------- pure-JAX reference ---------------------------- #
def reference(x, params):
    B, C, H, W = x.shape
    # --- ECAAttention ---
    ew = params["eca_w"]
    k = int(ew.shape[0])
    pad = k // 2
    gap = jnp.mean(x, axis=(2, 3))                               # (B, C)
    gp = jnp.pad(gap, ((0, 0), (pad, pad)))
    conv = sum(ew[j] * gp[:, j:j + C] for j in range(k))         # (B, C)
    x = x * jax.nn.sigmoid(conv)[:, :, None, None]
    # --- SpatialAttention ---
    avg = jnp.mean(x, axis=1, keepdims=True)
    mx = jnp.max(x, axis=1, keepdims=True)
    att = jnp.concatenate([avg, mx], axis=1)                     # (B, 2, H, W)
    outs = []
    for p in params["branches"]:
        pd = p["ks"] // 2
        y = lax.conv_general_dilated(
            att, p["w1"], (1, 1), padding=[(pd, pd), (pd, pd)],
            dimension_numbers=("NCHW", "OIHW", "NCHW"),
            precision=lax.Precision.HIGHEST)
        y = y + p["b1"][None, :, None, None]
        y = (p["g1"][None, :, None, None]
             * (y - p["m1"][None, :, None, None])
             / jnp.sqrt(p["v1"][None, :, None, None] + EPS)
             + p["be1"][None, :, None, None])
        y = jnp.maximum(y, 0.0)
        z = lax.conv_general_dilated(
            y, p["w2"], (1, 1), padding=[(0, 0), (0, 0)],
            dimension_numbers=("NCHW", "OIHW", "NCHW"),
            precision=lax.Precision.HIGHEST)
        z = z + p["b2"][None, :, None, None]
        z = (p["g2"][None, :, None, None]
             * (z - p["m2"][None, :, None, None])
             / jnp.sqrt(p["v2"][None, :, None, None] + EPS)
             + p["be2"][None, :, None, None])
        outs.append(jax.nn.sigmoid(z))
    w = jax.nn.softmax(params["fusion_weights"])
    combined = sum(w[i] * outs[i] for i in range(NB))
    return x * combined + x


if __name__ == "__main__":
    key = jax.random.PRNGKey(0)
    kx, kp = jax.random.split(key)
    B, C, H, W = 2, 4, 16, 16
    x = jax.random.normal(kx, (B, C, H, W), jnp.float32)
    params = init_params(kp, C)

    out = combined_attention(x, params)
    out = jax.block_until_ready(out)

    ref = reference(x, params)
    assert out.shape == x.shape and out.dtype == x.dtype
    max_err = float(jnp.max(jnp.abs(out - ref)))
    assert jnp.allclose(out, ref, atol=5e-3, rtol=5e-3), max_err
    print("KERNEL_OK")
</pallas_src>

<mosaic_0001>
module attributes {stable_mosaic.version = 11 : i64} {
  func.func @kernel(%arg0: i32, %arg1: memref<4x256xf32, #tpu.memory_space<vmem>>, %arg2: memref<48x99xf32, #tpu.memory_space<vmem>>, %arg3: memref<99x256xf32, #tpu.memory_space<vmem>>, %arg4: memref<3x48xf32, #tpu.memory_space<vmem>>, %arg5: memref<3xf32, #tpu.memory_space<smem>>, %arg6: memref<3xf32, #tpu.memory_space<smem>>, %arg7: memref<1xf32, #tpu.memory_space<smem>>, %arg8: memref<4x256xf32, #tpu.memory_space<vmem>>, %arg9: memref<99x256xf32, #tpu.memory_space<vmem>>) attributes {dimension_semantics = [#tpu.dimension_semantics<parallel>], iteration_bounds = array<i64: 2>, scalar_prefetch = 0 : i64, scratch_operands = 1 : i64, tpu.core_type = #tpu.core_type<tc>, window_params = [{transform_indices = @transform_0, window_bounds = array<i64: 4, 256>}, {pipeline_mode = #tpu.pipeline_mode<synchronous>, transform_indices = @transform_1, window_bounds = array<i64: 48, 99>}, {pipeline_mode = #tpu.pipeline_mode<synchronous>, transform_indices = @transform_2, window_bounds = array<i64: 99, 256>}, {pipeline_mode = #tpu.pipeline_mode<synchronous>, transform_indices = @transform_3, window_bounds = array<i64: 3, 48>}, {transform_indices = @transform_4, window_bounds = array<i64: 3>}, {transform_indices = @transform_5, window_bounds = array<i64: 3>}, {transform_indices = @transform_6, window_bounds = array<i64: 1>}, {transform_indices = @transform_7, window_bounds = array<i64: 4, 256>}]} {
    %c0 = arith.constant 0 : index
    %c0_0 = arith.constant 0 : index
    %0 = vector.load %arg1[%c0, %c0_0] : memref<4x256xf32, #tpu.memory_space<vmem>>, vector<4x256xf32>
    %cst = arith.constant dense<0.000000e+00> : vector<4xf32>
    %1 = vector.multi_reduction <add>, %0, %cst [1] : vector<4x256xf32> to vector<4xf32>
    %2 = vector.shape_cast %1 : vector<4xf32> to vector<4x1xf32>
    %cst_1 = arith.constant 2.560000e+02 : f32
    %3 = vector.broadcast %cst_1 : f32 to vector<4x1xf32>
    %4 = arith.divf %2, %3 : vector<4x1xf32>
    %cst_2 = arith.constant 0.000000e+00 : f32
    %5 = vector.broadcast %cst_2 : f32 to vector<4x1xf32>
    %c0_3 = arith.constant 0 : index
    %6 = memref.load %arg7[%c0_3] : memref<1xf32, #tpu.memory_space<smem>>
    %7 = vector.broadcast %6 : f32 to vector<4x1xf32>
    %8 = arith.mulf %7, %4 : vector<4x1xf32>
    %9 = arith.addf %5, %8 : vector<4x1xf32>
    %10 = arith.negf %9 : vector<4x1xf32>
    %11 = math.exp %10 : vector<4x1xf32>
    %cst_4 = arith.constant 1.000000e+00 : f32
    %12 = vector.broadcast %cst_4 : f32 to vector<4x1xf32>
    %13 = arith.addf %12, %11 : vector<4x1xf32>
    %14 = arith.divf %12, %13 : vector<4x1xf32>
    %15 = vector.broadcast %14 : vector<4x1xf32> to vector<4x256xf32>
    %16 = arith.mulf %0, %15 : vector<4x256xf32>
    %17 = vector.extract_strided_slice %16 {offsets = [0, 0], sizes = [1, 256], strides = [1, 1]} : vector<4x256xf32> to vector<1x256xf32>
    %18 = vector.extract_strided_slice %16 {offsets = [0, 0], sizes = [1, 256], strides = [1, 1]} : vector<4x256xf32> to vector<1x256xf32>
    %19 = vector.extract_strided_slice %16 {offsets = [1, 0], sizes = [1, 256], strides = [1, 1]} : vector<4x256xf32> to vector<1x256xf32>
    %20 = arith.addf %17, %19 : vector<1x256xf32>
    %21 = arith.maximumf %18, %19 : vector<1x256xf32>
    %22 = vector.extract_strided_slice %16 {offsets = [2, 0], sizes = [1, 256], strides = [1, 1]} : vector<4x256xf32> to vector<1x256xf32>
    %23 = arith.addf %20, %22 : vector<1x256xf32>
    %24 = arith.maximumf %21, %22 : vector<1x256xf32>
    %25 = vector.extract_strided_slice %16 {offsets = [3, 0], sizes = [1, 256], strides = [1, 1]} : vector<4x256xf32> to vector<1x256xf32>
    %26 = arith.addf %23, %25 : vector<1x256xf32>
    %27 = arith.maximumf %24, %25 : vector<1x256xf32>
    %cst_5 = arith.constant 2.500000e-01 : f32
    %28 = vector.broadcast %cst_5 : f32 to vector<1x256xf32>
    %29 = arith.mulf %26, %28 : vector<1x256xf32>
    %30 = tpu.concatenate %29, %27 in 0 : vector<1x256xf32>, vector<1x256xf32> -> vector<2x256xf32>
    %31 = tpu.concatenate %30, %30 in 1 : vector<2x256xf32>, vector<2x256xf32> -> vector<2x512xf32>
    %32 = vector.extract_strided_slice %31 {offsets = [0, 205], sizes = [2, 256], strides = [1, 1]} : vector<2x512xf32> to vector<2x256xf32>
    %c0_6 = arith.constant 0 : index
    %c0_7 = arith.constant 0 : index
    %33 = vector.load %arg9[%c0_6, %c0_7] : memref<99x256xf32, #tpu.memory_space<vmem>>, vector<2x256xf32>
    tpu.vector_store %arg9[%c0_6, %c0_7], %32 {strides = array<i32>} : memref<99x256xf32, #tpu.memory_space<vmem>>, vector<2x256xf32>,
    %34 = vector.extract_strided_slice %31 {offsets = [0, 206], sizes = [2, 256], strides = [1, 1]} : vector<2x512xf32> to vector<2x256xf32>
    %c2 = arith.constant 2 : index
    %c0_8 = arith.constant 0 : index
    %35 = vector.load %arg9[%c2, %c0_8] : memref<99x256xf32, #tpu.memory_space<vmem>>, vector<2x256xf32>
    tpu.vector_store %arg9[%c2, %c0_8], %34 {strides = array<i32>} : memref<99x256xf32, #tpu.memory_space<vmem>>, vector<2x256xf32>,
    %36 = vector.extract_strided_slice %31 {offsets = [0, 207], sizes = [2, 256], strides = [1, 1]} : vector<2x512xf32> to vector<2x256xf32>
    %c4 = arith.constant 4 : index
    %c0_9 = arith.constant 0 : index
    %37 = vector.load %arg9[%c4, %c0_9] : memref<99x256xf32, #tpu.memory_space<vmem>>, vector<2x256xf32>
    tpu.vector_store %arg9[%c4, %c0_9], %36 {strides = array<i32>} : memref<99x256xf32, #tpu.memory_space<vmem>>, vector<2x256xf32>,
    %38 = vector.extract_strided_slice %31 {offsets = [0, 208], sizes = [2, 256], strides = [1, 1]} : vector<2x512xf32> to vector<2x256xf32>
    %c6 = arith.constant 6 : index
    %c0_10 = arith.constant 0 : index
    %39 = vector.load %arg9[%c6, %c0_10] : memref<99x256xf32, #tpu.memory_space<vmem>>, vector<2x256xf32>
    tpu.vector_store %arg9[%c6, %c0_10], %38 {strides = array<i32>} : memref<99x256xf32, #tpu.memory_space<vmem>>, vector<2x256xf32>,
    %40 = vector.extract_strided_slice %31 {offsets = [0, 209], sizes = [2, 256], strides = [1, 1]} : vector<2x512xf32> to vector<2x256xf32>
    %c8 = arith.constant 8 : index
    %c0_11 = arith.constant 0 : index
    %41 = vector.load %arg9[%c8, %c0_11] : memref<99x256xf32, #tpu.memory_space<vmem>>, vector<2x256xf32>
    tpu.vector_store %arg9[%c8, %c0_11], %40 {strides = array<i32>} : memref<99x256xf32, #tpu.memory_space<vmem>>, vector<2x256xf32>,
    %42 = vector.extract_strided_slice %31 {offsets = [0, 210], sizes = [2, 256], strides = [1, 1]} : vector<2x512xf32> to vector<2x256xf32>
    %c10 = arith.constant 10 : index
    %c0_12 = arith.constant 0 : index
    %43 = vector.load %arg9[%c10, %c0_12] : memref<99x256xf32, #tpu.memory_space<vmem>>, vector<2x256xf32>
    tpu.vector_store %arg9[%c10, %c0_12], %42 {strides = array<i32>} : memref<99x256xf32, #tpu.memory_space<vmem>>, vector<2x256xf32>,
    %44 = vector.extract_strided_slice %31 {offsets = [0, 211], sizes = [2, 256], strides = [1, 1]} : vector<2x512xf32> to vector<2x256xf32>
    %c12 = arith.constant 12 : index
    %c0_13 = arith.constant 0 : index
    %45 = vector.load %arg9[%c12, %c0_13] : memref<99x256xf32, #tpu.memory_space<vmem>>, vector<2x256xf32>
    tpu.vector_store %arg9[%c12, %c0_13], %44 {strides = array<i32>} : memref<99x256xf32, #tpu.memory_space<vmem>>, vector<2x256xf32>,
    %46 = vector.extract_strided_slice %31 {offsets = [0, 221], sizes = [2, 256], strides = [1, 1]} : vector<2x512xf32> to vector<2x256xf32>
    %c14 = arith.constant 14 : index
    %c0_14 = arith.constant 0 : index
    %47 = vector.load %arg9[%c14, %c0_14] : memref<99x256xf32, #tpu.memory_space<vmem>>, vector<2x256xf32>
    tpu.vector_store %arg9[%c14, %c0_14], %46 {strides = array<i32>} : memref<99x256xf32, #tpu.memory_space<vmem>>, vector<2x256xf32>,
    %48 = vector.extract_strided_slice %31 {offsets = [0, 222], sizes = [2, 256], strides = [1, 1]} : vector<2x512xf32> to vector<2x256xf32>
    %c16 = arith.constant 16 : index
    %c0_15 = arith.constant 0 : index
    %49 = vector.load %arg9[%c16, %c0_15] : memref<99x256xf32, #tpu.memory_space<vmem>>, vector<2x256xf32>
    tpu.vector_store %arg9[%c16, %c0_15], %48 {strides = array<i32>} : memref<99x256xf32, #tpu.memory_space<vmem>>, vector<2x256xf32>,
    %50 = vector.extract_strided_slice %31 {offsets = [0, 223], sizes = [2, 256], strides = [1, 1]} : vector<2x512xf32> to vector<2x256xf32>
    %c18 = arith.constant 18 : index
    %c0_16 = arith.constant 0 : index
    %51 = vector.load %arg9[%c18, %c0_16] : memref<99x256xf32, #tpu.memory_space<vmem>>, vector<2x256xf32>
    tpu.vector_store %arg9[%c18, %c0_16], %50 {strides = array<i32>} : memref<99x256xf32, #tpu.memory_space<vmem>>, vector<2x256xf32>,
    %52 = vector.extract_strided_slice %31 {offsets = [0, 224], sizes = [2, 256], strides = [1, 1]} : vector<2x512xf32> to vector<2x256xf32>
    %c20 = arith.constant 20 : index
    %c0_17 = arith.constant 0 : index
    %53 = vector.load %arg9[%c20, %c0_17] : memref<99x256xf32, #tpu.memory_space<vmem>>, vector<2x256xf32>
    tpu.vector_store %arg9[%c20, %c0_17], %52 {strides = array<i32>} : memref<99x256xf32, #tpu.memory_space<vmem>>, vector<2x256xf32>,
    %54 = vector.extract_strided_slice %31 {offsets = [0, 225], sizes = [2, 256], strides = [1, 1]} : vector<2x512xf32> to vector<2x256xf32>
    %c22 = arith.constant 22 : index
    %c0_18 = arith.constant 0 : index
    %55 = vector.load %arg9[%c22, %c0_18] : memref<99x256xf32, #tpu.memory_space<vmem>>, vector<2x256xf32>
    tpu.vector_store %arg9[%c22, %c0_18], %54 {strides = array<i32>} : memref<99x256xf32, #tpu.memory_space<vmem>>, vector<2x256xf32>,
    %56 = vector.extract_strided_slice %31 {offsets = [0, 226], sizes = [2, 256], strides = [1, 1]} : vector<2x512xf32> to vector<2x256xf32>
    %c24 = arith.constant 24 : index
    %c0_19 = arith.constant 0 : index
    %57 = vector.load %arg9[%c24, %c0_19] : memref<99x256xf32, #tpu.memory_space<vmem>>, vector<2x256xf32>
    tpu.vector_store %arg9[%c24, %c0_19], %56 {strides = array<i32>} : memref<99x256xf32, #tpu.memory_space<vmem>>, vector<2x256xf32>,
    %58 = vector.extract_strided_slice %31 {offsets = [0, 227], sizes = [2, 256], strides = [1, 1]} : vector<2x512xf32> to vector<2x256xf32>
    %c26 = arith.constant 26 : index
    %c0_20 = arith.constant 0 : index
    %59 = vector.load %arg9[%c26, %c0_20] : memref<99x256xf32, #tpu.memory_space<vmem>>, vector<2x256xf32>
    tpu.vector_store %arg9[%c26, %c0_20], %58 {strides = array<i32>} : memref<99x256xf32, #tpu.memory_space<vmem>>, vector<2x256xf32>,
    %60 = vector.extract_strided_slice %31 {offsets = [0, 237], sizes = [2, 256], strides = [1, 1]} : vector<2x512xf32> to vector<2x256xf32>
    %c28 = arith.constant 28 : index
    %c0_21 = arith.constant 0 : index
    %61 = vector.load %arg9[%c28, %c0_21] : memref<99x256xf32, #tpu.memory_space<vmem>>, vector<2x256xf32>
    tpu.vector_store %arg9[%c28, %c0_21], %60 {strides = array<i32>} : memref<99x256xf32, #tpu.memory_space<vmem>>, vector<2x256xf32>,
    %62 = vector.extract_strided_slice %31 {offsets = [0, 238], sizes = [2, 256], strides = [1, 1]} : vector<2x512xf32> to vector<2x256xf32>
    %c30 = arith.constant 30 : index
    %c0_22 = arith.constant 0 : index
    %63 = vector.load %arg9[%c30, %c0_22] : memref<99x256xf32, #tpu.memory_space<vmem>>, vector<2x256xf32>
    tpu.vector_store %arg9[%c30, %c0_22], %62 {strides = array<i32>} : memref<99x256xf32, #tpu.memory_space<vmem>>, vector<2x256xf32>,
    %64 = vector.extract_strided_slice %31 {offsets = [0, 239], sizes = [2, 256], strides = [1, 1]} : vector<2x512xf32> to vector<2x256xf32>
    %c32 = arith.constant 32 : index
    %c0_23 = arith.constant 0 : index
    %65 = vector.load %arg9[%c32, %c0_23] : memref<99x256xf32, #tpu.memory_space<vmem>>, vector<2x256xf32>
    tpu.vector_store %arg9[%c32, %c0_23], %64 {strides = array<i32>} : memref<99x256xf32, #tpu.memory_space<vmem>>, vector<2x256xf32>,
    %66 = vector.extract_strided_slice %31 {offsets = [0, 240], sizes = [2, 256], strides = [1, 1]} : vector<2x512xf32> to vector<2x256xf32>
    %c34 = arith.constant 34 : index
    %c0_24 = arith.constant 0 : index
    %67 = vector.load %arg9[%c34, %c0_24] : memref<99x256xf32, #tpu.memory_space<vmem>>, vector<2x256xf32>
    tpu.vector_store %arg9[%c34, %c0_24], %66 {strides = array<i32>} : memref<99x256xf32, #tpu.memory_space<vmem>>, vector<2x256xf32>,
    %68 = vector.extract_strided_slice %31 {offsets = [0, 241], sizes = [2, 256], strides = [1, 1]} : vector<2x512xf32> to vector<2x256xf32>
    %c36 = arith.constant 36 : index
    %c0_25 = arith.constant 0 : index
    %69 = vector.load %arg9[%c36, %c0_25] : memref<99x256xf32, #tpu.memory_space<vmem>>, vector<2x256xf32>
    tpu.vector_store %arg9[%c36, %c0_25], %68 {strides = array<i32>} : memref<99x256xf32, #tpu.memory_space<vmem>>, vector<2x256xf32>,
    %70 = vector.extract_strided_slice %31 {offsets = [0, 242], sizes = [2, 256], strides = [1, 1]} : vector<2x512xf32> to vector<2x256xf32>
    %c38 = arith.constant 38 : index
    %c0_26 = arith.constant 0 : index
    %71 = vector.load %arg9[%c38, %c0_26] : memref<99x256xf32, #tpu.memory_space<vmem>>, vector<2x256xf32>
    tpu.vector_store %arg9[%c38, %c0_26], %70 {strides = array<i32>} : memref<99x256xf32, #tpu.memory_space<vmem>>, vector<2x256xf32>,
    %72 = vector.extract_strided_slice %31 {offsets = [0, 243], sizes = [2, 256], strides = [1, 1]} : vector<2x512xf32> to vector<2x256xf32>
    %c40 = arith.constant 40 : index
    %c0_27 = arith.constant 0 : index
    %73 = vector.load %arg9[%c40, %c0_27] : memref<99x256xf32, #tpu.memory_space<vmem>>, vector<2x256xf32>
    tpu.vector_store %arg9[%c40, %c0_27], %72 {strides = array<i32>} : memref<99x256xf32, #tpu.memory_space<vmem>>, vector<2x256xf32>,
    %74 = vector.extract_strided_slice %31 {offsets = [0, 253], sizes = [2, 256], strides = [1, 1]} : vector<2x512xf32> to vector<2x256xf32>
    %c42 = arith.constant 42 : index
    %c0_28 = arith.constant 0 : index
    %75 = vector.load %arg9[%c42, %c0_28] : memref<99x256xf32, #tpu.memory_space<vmem>>, vector<2x256xf32>
    tpu.vector_store %arg9[%c42, %c0_28], %74 {strides = array<i32>} : memref<99x256xf32, #tpu.memory_space<vmem>>, vector<2x256xf32>,
    %76 = vector.extract_strided_slice %31 {offsets = [0, 254], sizes = [2, 256], strides = [1, 1]} : vector<2x512xf32> to vector<2x256xf32>
    %c44 = arith.constant 44 : index
    %c0_29 = arith.constant 0 : index
    %77 = vector.load %arg9[%c44, %c0_29] : memref<99x256xf32, #tpu.memory_space<vmem>>, vector<2x256xf32>
    tpu.vector_store %arg9[%c44, %c0_29], %76 {strides = array<i32>} : memref<99x256xf32, #tpu.memory_space<vmem>>, vector<2x256xf32>,
    %78 = vector.extract_strided_slice %31 {offsets = [0, 255], sizes = [2, 256], strides = [1, 1]} : vector<2x512xf32> to vector<2x256xf32>
    %c46 = arith.constant 46 : index
    %c0_30 = arith.constant 0 : index
    %79 = vector.load %arg9[%c46, %c0_30] : memref<99x256xf32, #tpu.memory_space<vmem>>, vector<2x256xf32>
    tpu.vector_store %arg9[%c46, %c0_30], %78 {strides = array<i32>} : memref<99x256xf32, #tpu.memory_space<vmem>>, vector<2x256xf32>,
    %80 = vector.extract_strided_slice %31 {offsets = [0, 0], sizes = [2, 256], strides = [1, 1]} : vector<2x512xf32> to vector<2x256xf32>
    %c48 = arith.constant 48 : index
    %c0_31 = arith.constant 0 : index
    %81 = vector.load %arg9[%c48, %c0_31] : memref<99x256xf32, #tpu.memory_space<vmem>>, vector<2x256xf32>
    tpu.vector_store %arg9[%c48, %c0_31], %80 {strides = array<i32>} : memref<99x256xf32, #tpu.memory_space<vmem>>, vector<2x256xf32>,
    %82 = vector.extract_strided_slice %31 {offsets = [0, 1], sizes = [2, 256], strides = [1, 1]} : vector<2x512xf32> to vector<2x256xf32>
    %c50 = arith.constant 50 : index
    %c0_32 = arith.constant 0 : index
    %83 = vector.load %arg9[%c50, %c0_32] : memref<99x256xf32, #tpu.memory_space<vmem>>, vector<2x256xf32>
    tpu.vector_store %arg9[%c50, %c0_32], %82 {strides = array<i32>} : memref<99x256xf32, #tpu.memory_space<vmem>>, vector<2x256xf32>,
    %84 = vector.extract_strided_slice %31 {offsets = [0, 2], sizes = [2, 256], strides = [1, 1]} : vector<2x512xf32> to vector<2x256xf32>
    %c52 = arith.constant 52 : index
    %c0_33 = arith.constant 0 : index
    %85 = vector.load %arg9[%c52, %c0_33] : memref<99x256xf32, #tpu.memory_space<vmem>>, vector<2x256xf32>
    tpu.vector_store %arg9[%c52, %c0_33], %84 {strides = array<i32>} : memref<99x256xf32, #tpu.memory_space<vmem>>, vector<2x256xf32>,
    %86 = vector.extract_strided_slice %31 {offsets = [0, 3], sizes = [2, 256], strides = [1, 1]} : vector<2x512xf32> to vector<2x256xf32>
    %c54 = arith.constant 54 : index
    %c0_34 = arith.constant 0 : index
    %87 = vector.load %arg9[%c54, %c0_34] : memref<99x256xf32, #tpu.memory_space<vmem>>, vector<2x256xf32>
    tpu.vector_store %arg9[%c54, %c0_34], %86 {strides = array<i32>} : memref<99x256xf32, #tpu.memory_space<vmem>>, vector<2x256xf32>,
    %88 = vector.extract_strided_slice %31 {offsets = [0, 13], sizes = [2, 256], strides = [1, 1]} : vector<2x512xf32> to vector<2x256xf32>
    %c56 = arith.constant 56 : index
    %c0_35 = arith.constant 0 : index
    %89 = vector.load %arg9[%c56, %c0_35] : memref<99x256xf32, #tpu.memory_space<vmem>>, vector<2x256xf32>
    tpu.vector_store %arg9[%c56, %c0_35], %88 {strides = array<i32>} : memref<99x256xf32, #tpu.memory_space<vmem>>, vector<2x256xf32>,
    %90 = vector.extract_strided_slice %31 {offsets = [0, 14], sizes = [2, 256], strides = [1, 1]} : vector<2x512xf32> to vector<2x256xf32>
    %c58 = arith.constant 58 : index
    %c0_36 = arith.constant 0 : index
    %91 = vector.load %arg9[%c58, %c0_36] : memref<99x256xf32, #tpu.memory_space<vmem>>, vector<2x256xf32>
    tpu.vector_store %arg9[%c58, %c0_36], %90 {strides = array<i32>} : memref<99x256xf32, #tpu.memory_space<vmem>>, vector<2x256xf32>,
    %92 = vector.extract_strided_slice %31 {offsets = [0, 15], sizes = [2, 256], strides = [1, 1]} : vector<2x512xf32> to vector<2x256xf32>
    %c60 = arith.constant 60 : index
    %c0_37 = arith.constant 0 : index
    %93 = vector.load %arg9[%c60, %c0_37] : memref<99x256xf32, #tpu.memory_space<vmem>>, vector<2x256xf32>
    tpu.vector_store %arg9[%c60, %c0_37], %92 {strides = array<i32>} : memref<99x256xf32, #tpu.memory_space<vmem>>, vector<2x256xf32>,
    %94 = vector.extract_strided_slice %31 {offsets = [0, 16], sizes = [2, 256], strides = [1, 1]} : vector<2x512xf32> to vector<2x256xf32>
    %c62 = arith.constant 62 : index
    %c0_38 = arith.constant 0 : index
    %95 = vector.load %arg9[%c62, %c0_38] : memref<99x256xf32, #tpu.memory_space<vmem>>, vector<2x256xf32>
    tpu.vector_store %arg9[%c62, %c0_38], %94 {strides = array<i32>} : memref<99x256xf32, #tpu.memory_space<vmem>>, vector<2x256xf32>,
    %96 = vector.extract_strided_slice %31 {offsets = [0, 17], sizes = [2, 256], strides = [1, 1]} : vector<2x512xf32> to vector<2x256xf32>
    %c64 = arith.constant 64 : index
    %c0_39 = arith.constant 0 : index
    %97 = vector.load %arg9[%c64, %c0_39] : memref<99x256xf32, #tpu.memory_space<vmem>>, vector<2x256xf32>
    tpu.vector_store %arg9[%c64, %c0_39], %96 {strides = array<i32>} : memref<99x256xf32, #tpu.memory_space<vmem>>, vector<2x256xf32>,
    %98 = vector.extract_strided_slice %31 {offsets = [0, 18], sizes = [2, 256], strides = [1, 1]} : vector<2x512xf32> to vector<2x256xf32>
    %c66 = arith.constant 66 : index
    %c0_40 = arith.constant 0 : index
    %99 = vector.load %arg9[%c66, %c0_40] : memref<99x256xf32, #tpu.memory_space<vmem>>, vector<2x256xf32>
    tpu.vector_store %arg9[%c66, %c0_40], %98 {strides = array<i32>} : memref<99x256xf32, #tpu.memory_space<vmem>>, vector<2x256xf32>,
    %100 = vector.extract_strided_slice %31 {offsets = [0, 19], sizes = [2, 256], strides = [1, 1]} : vector<2x512xf32> to vector<2x256xf32>
    %c68 = arith.constant 68 : index
    %c0_41 = arith.constant 0 : index
    %101 = vector.load %arg9[%c68, %c0_41] : memref<99x256xf32, #tpu.memory_space<vmem>>, vector<2x256xf32>
    tpu.vector_store %arg9[%c68, %c0_41], %100 {strides = array<i32>} : memref<99x256xf32, #tpu.memory_space<vmem>>, vector<2x256xf32>,
    %102 = vector.extract_strided_slice %31 {offsets = [0, 29], sizes = [2, 256], strides = [1, 1]} : vector<2x512xf32> to vector<2x256xf32>
    %c70 = arith.constant 70 : index
    %c0_42 = arith.constant 0 : index
    %103 = vector.load %arg9[%c70, %c0_42] : memref<99x256xf32, #tpu.memory_space<vmem>>, vector<2x256xf32>
    tpu.vector_store %arg9[%c70, %c0_42], %102 {strides = array<i32>} : memref<99x256xf32, #tpu.memory_space<vmem>>, vector<2x256xf32>,
    %104 = vector.extract_strided_slice %31 {offsets = [0, 30], sizes = [2, 256], strides = [1, 1]} : vector<2x512xf32> to vector<2x256xf32>
    %c72 = arith.constant 72 : index
    %c0_43 = arith.constant 0 : index
    %105 = vector.load %arg9[%c72, %c0_43] : memref<99x256xf32, #tpu.memory_space<vmem>>, vector<2x256xf32>
    tpu.vector_store %arg9[%c72, %c0_43], %104 {strides = array<i32>} : memref<99x256xf32, #tpu.memory_space<vmem>>, vector<2x256xf32>,
    %106 = vector.extract_strided_slice %31 {offsets = [0, 31], sizes = [2, 256], strides = [1, 1]} : vector<2x512xf32> to vector<2x256xf32>
    %c74 = arith.constant 74 : index
    %c0_44 = arith.constant 0 : index
    %107 = vector.load %arg9[%c74, %c0_44] : memref<99x256xf32, #tpu.memory_space<vmem>>, vector<2x256xf32>
    tpu.vector_store %arg9[%c74, %c0_44], %106 {strides = array<i32>} : memref<99x256xf32, #tpu.memory_space<vmem>>, vector<2x256xf32>,
    %108 = vector.extract_strided_slice %31 {offsets = [0, 32], sizes = [2, 256], strides = [1, 1]} : vector<2x512xf32> to vector<2x256xf32>
    %c76 = arith.constant 76 : index
    %c0_45 = arith.constant 0 : index
    %109 = vector.load %arg9[%c76, %c0_45] : memref<99x256xf32, #tpu.memory_space<vmem>>, vector<2x256xf32>
    tpu.vector_store %arg9[%c76, %c0_45], %108 {strides = array<i32>} : memref<99x256xf32, #tpu.memory_space<vmem>>, vector<2x256xf32>,
    %110 = vector.extract_strided_slice %31 {offsets = [0, 33], sizes = [2, 256], strides = [1, 1]} : vector<2x512xf32> to vector<2x256xf32>
    %c78 = arith.constant 78 : index
    %c0_46 = arith.constant 0 : index
    %111 = vector.load %arg9[%c78, %c0_46] : memref<99x256xf32, #tpu.memory_space<vmem>>, vector<2x256xf32>
    tpu.vector_store %arg9[%c78, %c0_46], %110 {strides = array<i32>} : memref<99x256xf32, #tpu.memory_space<vmem>>, vector<2x256xf32>,
    %112 = vector.extract_strided_slice %31 {offsets = [0, 34], sizes = [2, 256], strides = [1, 1]} : vector<2x512xf32> to vector<2x256xf32>
    %c80 = arith.constant 80 : index
    %c0_47 = arith.constant 0 : index
    %113 = vector.load %arg9[%c80, %c0_47] : memref<99x256xf32, #tpu.memory_space<vmem>>, vector<2x256xf32>
    tpu.vector_store %arg9[%c80, %c0_47], %112 {strides = array<i32>} : memref<99x256xf32, #tpu.memory_space<vmem>>, vector<2x256xf32>,
    %114 = vector.extract_strided_slice %31 {offsets = [0, 35], sizes = [2, 256], strides = [1, 1]} : vector<2x512xf32> to vector<2x256xf32>
    %c82 = arith.constant 82 : index
    %c0_48 = arith.constant 0 : index
    %115 = vector.load %arg9[%c82, %c0_48] : memref<99x256xf32, #tpu.memory_space<vmem>>, vector<2x256xf32>
    tpu.vector_store %arg9[%c82, %c0_48], %114 {strides = array<i32>} : memref<99x256xf32, #tpu.memory_space<vmem>>, vector<2x256xf32>,
    %116 = vector.extract_strided_slice %31 {offsets = [0, 45], sizes = [2, 256], strides = [1, 1]} : vector<2x512xf32> to vector<2x256xf32>
    %c84 = arith.constant 84 : index
    %c0_49 = arith.constant 0 : index
    %117 = vector.load %arg9[%c84, %c0_49] : memref<99x256xf32, #tpu.memory_space<vmem>>, vector<2x256xf32>
    tpu.vector_store %arg9[%c84, %c0_49], %116 {strides = array<i32>} : memref<99x256xf32, #tpu.memory_space<vmem>>, vector<2x256xf32>,
    %118 = vector.extract_strided_slice %31 {offsets = [0, 46], sizes = [2, 256], strides = [1, 1]} : vector<2x512xf32> to vector<2x256xf32>
    %c86 = arith.constant 86 : index
    %c0_50 = arith.constant 0 : index
    %119 = vector.load %arg9[%c86, %c0_50] : memref<99x256xf32, #tpu.memory_space<vmem>>, vector<2x256xf32>
    tpu.vector_store %arg9[%c86, %c0_50], %118 {strides = array<i32>} : memref<99x256xf32, #tpu.memory_space<vmem>>, vector<2x256xf32>,
    %120 = vector.extract_strided_slice %31 {offsets = [0, 47], sizes = [2, 256], strides = [1, 1]} : vector<2x512xf32> to vector<2x256xf32>
    %c88 = arith.constant 88 : index
    %c0_51 = arith.constant 0 : index
    %121 = vector.load %arg9[%c88, %c0_51] : memref<99x256xf32, #tpu.memory_space<vmem>>, vector<2x256xf32>
    tpu.vector_store %arg9[%c88, %c0_51], %120 {strides = array<i32>} : memref<99x256xf32, #tpu.memory_space<vmem>>, vector<2x256xf32>,
    %122 = vector.extract_strided_slice %31 {offsets = [0, 48], sizes = [2, 256], strides = [1, 1]} : vector<2x512xf32> to vector<2x256xf32>
    %c90 = arith.constant 90 : index
    %c0_52 = arith.constant 0 : index
    %123 = vector.load %arg9[%c90, %c0_52] : memref<99x256xf32, #tpu.memory_space<vmem>>, vector<2x256xf32>
    tpu.vector_store %arg9[%c90, %c0_52], %122 {strides = array<i32>} : memref<99x256xf32, #tpu.memory_space<vmem>>, vector<2x256xf32>,
    %124 = vector.extract_strided_slice %31 {offsets = [0, 49], sizes = [2, 256], strides = [1, 1]} : vector<2x512xf32> to vector<2x256xf32>
    %c92 = arith.constant 92 : index
    %c0_53 = arith.constant 0 : index
    %125 = vector.load %arg9[%c92, %c0_53] : memref<99x256xf32, #tpu.memory_space<vmem>>, vector<2x256xf32>
    tpu.vector_store %arg9[%c92, %c0_53], %124 {strides = array<i32>} : memref<99x256xf32, #tpu.memory_space<vmem>>, vector<2x256xf32>,
    %126 = vector.extract_strided_slice %31 {offsets = [0, 50], sizes = [2, 256], strides = [1, 1]} : vector<2x512xf32> to vector<2x256xf32>
    %c94 = arith.constant 94 : index
    %c0_54 = arith.constant 0 : index
    %127 = vector.load %arg9[%c94, %c0_54] : memref<99x256xf32, #tpu.memory_space<vmem>>, vector<2x256xf32>
    tpu.vector_store %arg9[%c94, %c0_54], %126 {strides = array<i32>} : memref<99x256xf32, #tpu.memory_space<vmem>>, vector<2x256xf32>,
    %128 = vector.extract_strided_slice %31 {offsets = [0, 51], sizes = [2, 256], strides = [1, 1]} : vector<2x512xf32> to vector<2x256xf32>
    %c96 = arith.constant 96 : index
    %c0_55 = arith.constant 0 : index
    %129 = vector.load %arg9[%c96, %c0_55] : memref<99x256xf32, #tpu.memory_space<vmem>>, vector<2x256xf32>
    tpu.vector_store %arg9[%c96, %c0_55], %128 {strides = array<i32>} : memref<99x256xf32, #tpu.memory_space<vmem>>, vector<2x256xf32>,
    %cst_56 = arith.constant 1.000000e+00 : f32
    %130 = vector.broadcast %cst_56 : f32 to vector<1x256xf32>
    %c98 = arith.constant 98 : index
    %c0_57 = arith.constant 0 : index
    %131 = vector.load %arg9[%c98, %c0_57] : memref<99x256xf32, #tpu.memory_space<vmem>>, vector<1x256xf32>
    tpu.vector_store %arg9[%c98, %c0_57], %130 {strides = array<i32>} : memref<99x256xf32, #tpu.memory_space<vmem>>, vector<1x256xf32>,
    %c0_58 = arith.constant 0 : index
    %c0_59 = arith.constant 0 : index
    %132 = vector.load %arg9[%c0_58, %c0_59] : memref<99x256xf32, #tpu.memory_space<vmem>>, vector<99x256xf32>
    %c0_60 = arith.constant 0 : index
    %c0_61 = arith.constant 0 : index
    %133 = vector.load %arg3[%c0_60, %c0_61] : memref<99x256xf32, #tpu.memory_space<vmem>>, vector<99x256xf32>
    %134 = arith.mulf %132, %133 : vector<99x256xf32>
    %c0_62 = arith.constant 0 : index
    %c0_63 = arith.constant 0 : index
    %135 = vector.load %arg2[%c0_62, %c0_63] : memref<48x99xf32, #tpu.memory_space<vmem>>, vector<48x99xf32>
    %cst_64 = arith.constant dense<0.000000e+00> : vector<48x256xf32>
    %136 = tpu.matmul %135, %134, %cst_64 {dimension_numbers = #tpu.dot_dimension_numbers<[1], [0], [0], [1], [0, 0, 1, 1], [], []>} : vector<48x99xf32>, vector<99x256xf32>, vector<48x256xf32> -> vector<48x256xf32>
    %cst_65 = arith.constant 0.000000e+00 : f32
    %137 = vector.broadcast %cst_65 : f32 to vector<48x256xf32>
    %138 = arith.maximumf %136, %137 : vector<48x256xf32>
    %c0_66 = arith.constant 0 : index
    %c0_67 = arith.constant 0 : index
    %139 = vector.load %arg4[%c0_66, %c0_67] : memref<3x48xf32, #tpu.memory_space<vmem>>, vector<3x48xf32>
    %cst_68 = arith.constant dense<0.000000e+00> : vector<3x256xf32>
    %140 = tpu.matmul %139, %138, %cst_68 {dimension_numbers = #tpu.dot_dimension_numbers<[1], [0], [0], [1], [0, 0, 1, 1], [], []>} : vector<3x48xf32>, vector<48x256xf32>, vector<3x256xf32> -> vector<3x256xf32>
    %cst_69 = arith.constant 0.000000e+00 : f32
    %141 = vector.broadcast %cst_69 : f32 to vector<1x256xf32>
    %c0_70 = arith.constant 0 : index
    %142 = memref.load %arg6[%c0_70] : memref<3xf32, #tpu.memory_space<smem>>
    %143 = vector.extract_strided_slice %140 {offsets = [0, 0], sizes = [1, 256], strides = [1, 1]} : vector<3x256xf32> to vector<1x256xf32>
    %c0_71 = arith.constant 0 : index
    %144 = memref.load %arg5[%c0_71] : memref<3xf32, #tpu.memory_space<smem>>
    %145 = vector.broadcast %144 : f32 to vector<1x256xf32>
    %146 = arith.addf %143, %145 : vector<1x256xf32>
    %147 = arith.negf %146 : vector<1x256xf32>
    %148 = math.exp %147 : vector<1x256xf32>
    %cst_72 = arith.constant 1.000000e+00 : f32
    %149 = vector.broadcast %cst_72 : f32 to vector<1x256xf32>
    %150 = arith.addf %149, %148 : vector<1x256xf32>
    %151 = arith.divf %149, %150 : vector<1x256xf32>
    %152 = vector.broadcast %142 : f32 to vector<1x256xf32>
    %153 = arith.mulf %152, %151 : vector<1x256xf32>
    %154 = arith.addf %141, %153 : vector<1x256xf32>
    %c1 = arith.constant 1 : index
    %155 = memref.load %arg6[%c1] : memref<3xf32, #tpu.memory_space<smem>>
    %156 = vector.extract_strided_slice %140 {offsets = [1, 0], sizes = [1, 256], strides = [1, 1]} : vector<3x256xf32> to vector<1x256xf32>
    %c1_73 = arith.constant 1 : index
    %157 = memref.load %arg5[%c1_73] : memref<3xf32, #tpu.memory_space<smem>>
    %158 = vector.broadcast %157 : f32 to vector<1x256xf32>
    %159 = arith.addf %156, %158 : vector<1x256xf32>
    %160 = arith.negf %159 : vector<1x256xf32>
    %161 = math.exp %160 : vector<1x256xf32>
    %cst_74 = arith.constant 1.000000e+00 : f32
    %162 = vector.broadcast %cst_74 : f32 to vector<1x256xf32>
    %163 = arith.addf %162, %161 : vector<1x256xf32>
    %164 = arith.divf %162, %163 : vector<1x256xf32>
    %165 = vector.broadcast %155 : f32 to vector<1x256xf32>
    %166 = arith.mulf %165, %164 : vector<1x256xf32>
    %167 = arith.addf %154, %166 : vector<1x256xf32>
    %c2_75 = arith.constant 2 : index
    %168 = memref.load %arg6[%c2_75] : memref<3xf32, #tpu.memory_space<smem>>
    %169 = vector.extract_strided_slice %140 {offsets = [2, 0], sizes = [1, 256], strides = [1, 1]} : vector<3x256xf32> to vector<1x256xf32>
    %c2_76 = arith.constant 2 : index
    %170 = memref.load %arg5[%c2_76] : memref<3xf32, #tpu.memory_space<smem>>
    %171 = vector.broadcast %170 : f32 to vector<1x256xf32>
    %172 = arith.addf %169, %171 : vector<1x256xf32>
    %173 = arith.negf %172 : vector<1x256xf32>
    %174 = math.exp %173 : vector<1x256xf32>
    %cst_77 = arith.constant 1.000000e+00 : f32
    %175 = vector.broadcast %cst_77 : f32 to vector<1x256xf32>
    %176 = arith.addf %175, %174 : vector<1x256xf32>
    %177 = arith.divf %175, %176 : vector<1x256xf32>
    %178 = vector.broadcast %168 : f32 to vector<1x256xf32>
    %179 = arith.mulf %178, %177 : vector<1x256xf32>
    %180 = arith.addf %167, %179 : vector<1x256xf32>
    %cst_78 = arith.constant 1.000000e+00 : f32
    %181 = vector.broadcast %cst_78 : f32 to vector<1x256xf32>
    %182 = arith.addf %180, %181 : vector<1x256xf32>
    %183 = vector.broadcast %182 : vector<1x256xf32> to vector<4x256xf32>
    %184 = arith.mulf %16, %183 : vector<4x256xf32>
    %c0_79 = arith.constant 0 : index
    %c0_80 = arith.constant 0 : index
    %185 = vector.load %arg8[%c0_79, %c0_80] : memref<4x256xf32, #tpu.memory_space<vmem>>, vector<4x256xf32>
    tpu.vector_store %arg8[%c0_79, %c0_80], %184 {strides = array<i32>} : memref<4x256xf32, #tpu.memory_space<vmem>>, vector<4x256xf32>,
    return
  }
  func.func @transform_0(%arg0: i32) -> (i32, i32) {
    %c0_i32 = arith.constant 0 : i32
    %c0_i32_0 = arith.constant 0 : i32
    return %c0_i32, %arg0 : i32, i32
  }
  func.func @transform_1(%arg0: i32) -> (i32, i32) {
    %c0_i32 = arith.constant 0 : i32
    %c0_i32_0 = arith.constant 0 : i32
    %c0_i32_1 = arith.constant 0 : i32
    return %c0_i32, %c0_i32_0 : i32, i32
  }
  func.func @transform_2(%arg0: i32) -> (i32, i32) {
    %c0_i32 = arith.constant 0 : i32
    %c0_i32_0 = arith.constant 0 : i32
    %c0_i32_1 = arith.constant 0 : i32
    return %c0_i32, %c0_i32_0 : i32, i32
  }
  func.func @transform_3(%arg0: i32) -> (i32, i32) {
    %c0_i32 = arith.constant 0 : i32
    %c0_i32_0 = arith.constant 0 : i32
    %c0_i32_1 = arith.constant 0 : i32
    return %c0_i32, %c0_i32_0 : i32, i32
  }
  func.func @transform_4(%arg0: i32) -> i32 {
    %c0_i32 = arith.constant 0 : i32
    %c0_i32_0 = arith.constant 0 : i32
    return %c0_i32 : i32
  }
  func.func @transform_5(%arg0: i32) -> i32 {
    %c0_i32 = arith.constant 0 : i32
    %c0_i32_0 = arith.constant 0 : i32
    return %c0_i32 : i32
  }
  func.func @transform_6(%arg0: i32) -> i32 {
    %c0_i32 = arith.constant 0 : i32
    %c0_i32_0 = arith.constant 0 : i32
    return %c0_i32 : i32
  }
  func.func @transform_7(%arg0: i32) -> (i32, i32) {
    %c0_i32 = arith.constant 0 : i32
    %c0_i32_0 = arith.constant 0 : i32
    return %c0_i32, %arg0 : i32, i32
  }
}

</mosaic_0001>

<llo_original>
// kernel: tpu_custom_call.1
$region0: #{tpu_custom_call.1}
  #allocation0 [shape = 'u32[]', space=smem, size = 0x4, offset = 0x4, fixed_abs, tag = 'smem constant byte address 0x4 - core index']
  #allocation1 [shape = 'u32[144,128]{1,0:T(1,128)}', space=vmem, size = 0x12000, scoped, tag = 'internal scratch']
  #allocation2 [shape = 'f32[99,256]{1,0:T(8,128)}', space=vmem, size = 0x1a000, scoped, tag = 'scratch operand']
  #allocation3 [shape = 'f32[1]{0:T(128)S(6)}', space=smem, size = 0x200, scoped, tag = 'scoped memory for tpu_custom_call.1']
  %s0 = inlined_call_operand.hbm [shape: f32[4,512], index: 0, kind: input, shape index: {}]
  %s1 = inlined_call_operand.hbm [shape: f32[48,99], index: 1, kind: input, shape index: {}]
  %s2 = inlined_call_operand.hbm [shape: f32[99,256], index: 2, kind: input, shape index: {}]
  %s3 = inlined_call_operand.vmem [shape: f32[3,48], index: 3, kind: input, shape index: {}]
  %s4 = inlined_call_operand.vmem [shape: f32[3], index: 4, kind: input, shape index: {}]
  %s5 = inlined_call_operand.vmem [shape: f32[3], index: 5, kind: input, shape index: {}]
  %s6 = inlined_call_operand.<no memory space> [shape: f32[1], index: 6, kind: input, shape index: {}]
  %s7 = inlined_call_operand.hbm [shape: f32[4,512], index: 7, kind: output, shape index: {}]
  %s8 = sld [smem:[#allocation0]]
  $region81: #{tpu_custom_call.1} parent=0
    _
  %s10 = ssub.s32 1, %s8
  %s11 = scalar_select 0, %s10, %s8
  %12 = sst [smem:[#allocation3]] %s6
  $region1: #{tpu_custom_call.1} parent=0
    #allocation4 [shape = 'u8[8192]{0}', space=vmem, size = 0x2000, scoped, tag = 'input window, operand 0']
    #allocation5 [shape = 's32[2]{0}', space=sflag, size = 0x8, scoped, tag = 'scoped memory for tpu_custom_call.1']
    #allocation6 [shape = 's32[2]{0}', space=sflag, size = 0x8, scoped, tag = 'scoped memory for tpu_custom_call.1']
    #allocation7 [shape = 's32[2]{0}', space=sflag, size = 0x8, scoped, tag = 'scoped memory for tpu_custom_call.1']
    #allocation8 [shape = 'u8[24576]{0}', space=vmem, size = 0x6000, scoped, tag = 'input window, operand 1, single buffered']
    #allocation9 [shape = 's32[1]{0}', space=sflag, size = 0x4, scoped, tag = 'scoped memory for tpu_custom_call.1']
    #allocation10 [shape = 'u8[106496]{0}', space=vmem, size = 0x1a000, scoped, tag = 'input window, operand 2, single buffered']
    #allocation11 [shape = 'u8[512]{0}', space=smem, size = 0x200, scoped, tag = 'input window, operand 4, single buffered']
    #allocation12 [shape = 'u8[512]{0}', space=smem, size = 0x200, scoped, tag = 'input window, operand 5, single buffered']
    #allocation13 [shape = 's32[1]{0}', space=sflag, size = 0x4, scoped, tag = 'scoped memory for tpu_custom_call.1']
    #allocation14 [shape = 'u8[8192]{0}', space=vmem, size = 0x2000, scoped, tag = 'output window, operand 0']
    %13 = vsyncpa [#allocation5], 0
    %s14 = scalar_lea.sflag [#allocation5], 1
    %15 = vsyncpa %s14, 0
    %16 = vsyncpa [#allocation9], 0
    %17 = vsyncpa [#allocation7], 0
    %18 = vsyncpa [#allocation13], 0
    %19 = vsyncpa [#allocation6], 0
    %s20 = scalar_lea.sflag [#allocation6], 1
    %21 = vsyncpa %s20, 0
    loop: start=0, step=1, limit=4
    $region2: #{tpu_custom_call.1} parent=1 // loop_pre_header
      _
    $region3: #{tpu_custom_call.1} parent=1 // loop_header
      %s23 = sphi 0, %s27
      %p24 = scmp.ge.s32.totalorder %s23, 4
      %s33 = sphi 0, %s35
      %s36 = sphi 0, %s33
      %s37 = sphi 0, %s36
      %s53 = sphi 0, %s37
      %s57 = sphi 0, %s57
      %s59 = sphi 0, %s57
      %s60 = sphi 0, %s59
      %s74 = sphi 0, %s60
      %s78 = sphi 0, %s78
      %s80 = sphi 0, %s78
      %s81 = sphi 0, %s80
      %s95 = sphi 0, %s81
      %s99 = sphi 0, %s99
      %s101 = sphi 0, %s99
      %s102 = sphi 0, %s101
      %s116 = sphi 0, %s102
      %s120 = sphi 0, %s120
      %s122 = sphi 0, %s120
      %s123 = sphi 0, %s122
      %s137 = sphi 0, %s123
      %s141 = sphi 0, %s141
      %s143 = sphi 0, %s141
      %s144 = sphi 0, %s143
      %s158 = sphi 0, %s144
      %s162 = sphi 0, %s162
      %s164 = sphi 0, %s162
      %s165 = sphi 0, %s164
      %s179 = sphi 0, %s165
      %s185 = sphi 0, %s187
      %s188 = sphi 0, %s185
      %s189 = sphi 0, %s188
      %s205 = sphi 0, %s189
    $region4: #{tpu_custom_call.1} parent=1 // loop_header_branch
      %26 = sbr.rel (%p24) target = $region8
    $region5: #{tpu_custom_call.1} parent=1 // loop_body
      %s28 = ssub.s32 %s23, 1
      %s29 = ssub.s32 %s23, 2
      %s30 = sadd.s32 %s23, 1
      %s31 = ssub.s32 %s23, %s30
      %p32 = scmp.eq.s32.totalorder %s31, 0
      %s34 = sadd.s32 %s33, 1
      %s35 = scalar_select %p32, %s33, %s34
      %p38 = pneg %p32
      %p39 = scmp.eq.s32.totalorder %s23, 1
      %p40 = por %p38, %p39
      %p41 = scmp.ne.s32.totalorder %s33, %s36
      %p42 = scmp.eq.s32.totalorder %s23, 0
      %p43 = por %p41, %p42
      %p44 = scmp.ne.s32.totalorder %s33, %s36
      %p45 = scmp.eq.s32.totalorder %s28, 1
      %p46 = por %p44, %p45
      %p47 = scmp.ne.s32.totalorder %s36, %s37
      %p48 = scmp.eq.s32.totalorder %s28, 0
      %p49 = por %p47, %p48
      %p50 = scmp.ne.s32.totalorder %s36, %s37
      %p51 = scmp.eq.s32.totalorder %s29, 1
      %p52 = por %p50, %p51
      %p54 = scmp.ne.s32.totalorder %s37, %s53
      %p55 = scmp.eq.s32.totalorder %s29, 0
      %p56 = por %p54, %p55
      %s58 = sadd.s32 %s57, 1
      %p61 = scmp.eq.s32.totalorder %s23, 1
      %p62 = scmp.ne.s32.totalorder %s57, %s59
      %p63 = scmp.eq.s32.totalorder %s23, 0
      %p64 = por %p62, %p63
      %p65 = scmp.ne.s32.totalorder %s57, %s59
      %p66 = scmp.eq.s32.totalorder %s28, 1
      %p67 = por %p65, %p66
      %p68 = scmp.ne.s32.totalorder %s59, %s60
      %p69 = scmp.eq.s32.totalorder %s28, 0
      %p70 = por %p68, %p69
      %p71 = scmp.ne.s32.totalorder %s59, %s60
      %p72 = scmp.eq.s32.totalorder %s29, 1
      %p73 = por %p71, %p72
      %p75 = scmp.ne.s32.totalorder %s60, %s74
      %p76 = scmp.eq.s32.totalorder %s29, 0
      %p77 = por %p75, %p76
      %s79 = sadd.s32 %s78, 1
      %p82 = scmp.eq.s32.totalorder %s23, 1
      %p83 = scmp.ne.s32.totalorder %s78, %s80
      %p84 = scmp.eq.s32.totalorder %s23, 0
      %p85 = por %p83, %p84
      %p86 = scmp.ne.s32.totalorder %s78, %s80
      %p87 = scmp.eq.s32.totalorder %s28, 1
      %p88 = por %p86, %p87
      %p89 = scmp.ne.s32.totalorder %s80, %s81
      %p90 = scmp.eq.s32.totalorder %s28, 0
      %p91 = por %p89, %p90
      %p92 = scmp.ne.s32.totalorder %s80, %s81
      %p93 = scmp.eq.s32.totalorder %s29, 1
      %p94 = por %p92, %p93
      %p96 = scmp.ne.s32.totalorder %s81, %s95
      %p97 = scmp.eq.s32.totalorder %s29, 0
      %p98 = por %p96, %p97
      %s100 = sadd.s32 %s99, 1
      %p103 = scmp.eq.s32.totalorder %s23, 1
      %p104 = scmp.ne.s32.totalorder %s99, %s101
      %p105 = scmp.eq.s32.totalorder %s23, 0
      %p106 = por %p104, %p105
      %p107 = scmp.ne.s32.totalorder %s99, %s101
      %p108 = scmp.eq.s32.totalorder %s28, 1
      %p109 = por %p107, %p108
      %p110 = scmp.ne.s32.totalorder %s101, %s102
      %p111 = scmp.eq.s32.totalorder %s28, 0
      %p112 = por %p110, %p111
      %p113 = scmp.ne.s32.totalorder %s101, %s102
      %p114 = scmp.eq.s32.totalorder %s29, 1
      %p115 = por %p113, %p114
      %p117 = scmp.ne.s32.totalorder %s102, %s116
      %p118 = scmp.eq.s32.totalorder %s29, 0
      %p119 = por %p117, %p118
      %s121 = sadd.s32 %s120, 1
      %p124 = scmp.eq.s32.totalorder %s23, 1
      %p125 = scmp.ne.s32.totalorder %s120, %s122
      %p126 = scmp.eq.s32.totalorder %s23, 0
      %p127 = por %p125, %p126
      %p128 = scmp.ne.s32.totalorder %s120, %s122
      %p129 = scmp.eq.s32.totalorder %s28, 1
      %p130 = por %p128, %p129
      %p131 = scmp.ne.s32.totalorder %s122, %s123
      %p132 = scmp.eq.s32.totalorder %s28, 0
      %p133 = por %p131, %p132
      %p134 = scmp.ne.s32.totalorder %s122, %s123
      %p135 = scmp.eq.s32.totalorder %s29, 1
      %p136 = por %p134, %p135
      %p138 = scmp.ne.s32.totalorder %s123, %s137
      %p139 = scmp.eq.s32.totalorder %s29, 0
      %p140 = por %p138, %p139
      %s142 = sadd.s32 %s141, 1
      %p145 = scmp.eq.s32.totalorder %s23, 1
      %p146 = scmp.ne.s32.totalorder %s141, %s143
      %p147 = scmp.eq.s32.totalorder %s23, 0
      %p148 = por %p146, %p147
      %p149 = scmp.ne.s32.totalorder %s141, %s143
      %p150 = scmp.eq.s32.totalorder %s28, 1
      %p151 = por %p149, %p150
      %p152 = scmp.ne.s32.totalorder %s143, %s144
      %p153 = scmp.eq.s32.totalorder %s28, 0
      %p154 = por %p152, %p153
      %p155 = scmp.ne.s32.totalorder %s143, %s144
      %p156 = scmp.eq.s32.totalorder %s29, 1
      %p157 = por %p155, %p156
      %p159 = scmp.ne.s32.totalorder %s144, %s158
      %p160 = scmp.eq.s32.totalorder %s29, 0
      %p161 = por %p159, %p160
      %s163 = sadd.s32 %s162, 1
      %p166 = scmp.eq.s32.totalorder %s23, 1
      %p167 = scmp.ne.s32.totalorder %s162, %s164
      %p168 = scmp.eq.s32.totalorder %s23, 0
      %p169 = por %p167, %p168
      %p170 = scmp.ne.s32.totalorder %s162, %s164
      %p171 = scmp.eq.s32.totalorder %s28, 1
      %p172 = por %p170, %p171
      %p173 = scmp.ne.s32.totalorder %s164, %s165
      %p174 = scmp.eq.s32.totalorder %s28, 0
      %p175 = por %p173, %p174
      %p176 = scmp.ne.s32.totalorder %s164, %s165
      %p177 = scmp.eq.s32.totalorder %s29, 1
      %p178 = por %p176, %p177
      %p180 = scmp.ne.s32.totalorder %s165, %s179
      %p181 = scmp.eq.s32.totalorder %s29, 0
      %p182 = por %p180, %p181
      %s183 = ssub.s32 %s23, %s30
      %p184 = scmp.eq.s32.totalorder %s183, 0
      %s186 = sadd.s32 %s185, 1
      %s187 = scalar_select %p184, %s185, %s186
      %p190 = pneg %p184
      %p191 = scmp.eq.s32.totalorder %s23, 1
      %p192 = por %p190, %p191
      %p193 = scmp.ne.s32.totalorder %s185, %s188
      %p194 = scmp.eq.s32.totalorder %s23, 0
      %p195 = por %p193, %p194
      %p196 = scmp.ne.s32.totalorder %s185, %s188
      %p197 = scmp.eq.s32.totalorder %s28, 1
      %p198 = por %p196, %p197
      %p199 = scmp.ne.s32.totalorder %s188, %s189
      %p200 = scmp.eq.s32.totalorder %s28, 0
      %p201 = por %p199, %p200
      %p202 = scmp.ne.s32.totalorder %s188, %s189
      %p203 = scmp.eq.s32.totalorder %s29, 1
      %p204 = por %p202, %p203
      %p206 = scmp.ne.s32.totalorder %s189, %s205
      %p207 = scmp.eq.s32.totalorder %s29, 0
      %p208 = por %p206, %p207
      %p209 = scmp.le.s32.totalorder 1, %s23
      %p210 = scmp.lt.s32.totalorder %s23, 3
      %p211 = pnand %p209, %p210
      %p212 = pneg %p211
      // Predicated region
      $region9: #{tpu_custom_call.1} parent=5 // pred_check
        _
      $region10: #{tpu_custom_call.1} parent=5 // pred_check_branch
        %214 = sbr.rel (%p211) target = $region12
      $region11: #{tpu_custom_call.1} parent=5 // pred_region
        %s215 = ssub.s32 %s23, 1
        // Predicated region
        $region13: #{tpu_custom_call.1} parent=11 // pred_check
          %p216 = pneg %p70
        $region14: #{tpu_custom_call.1} parent=11 // pred_check_branch
          %218 = sbr.rel (%p216) target = $region16
        $region15: #{tpu_custom_call.1} parent=11 // pred_region
          %s220 = ssub.s32 768, 768
          %221 = vsyncadd [#allocation9], %s220
          %s222 = sshll.u32 [#allocation8], 4
          %s223 = int_to_ptr.vmem [resolvable:$true] %s222
          %228 = dma.hbm_to_vmem [thread:$0]  %s1, 768, %s223, [#allocation9], 128, 128, 8
        $region16: #{tpu_custom_call.1} parent=11 // pred_fallthru
          _
        // Predicated region
        $region17: #{tpu_custom_call.1} parent=11 // pred_check
          %p229 = pneg %p91
        $region18: #{tpu_custom_call.1} parent=11 // pred_check_branch
          %231 = sbr.rel (%p229) target = $region20
        $region19: #{tpu_custom_call.1} parent=11 // pred_region
          %s233 = ssub.s32 3328, 3328
          %234 = vsyncadd [#allocation9], %s233
          %s235 = sshll.u32 [#allocation10], 4
          %s236 = int_to_ptr.vmem [resolvable:$true] %s235
          %241 = dma.hbm_to_vmem [thread:$0]  %s2, 3328, %s236, [#allocation9], 256, 256, 16
        $region20: #{tpu_custom_call.1} parent=11 // pred_fallthru
          _
        // Predicated region
        $region21: #{tpu_custom_call.1} parent=11 // pred_check
          %p242 = pneg %p112
        $region22: #{tpu_custom_call.1} parent=11 // pred_check_branch
          %244 = sbr.rel (%p242) target = $region24
        $region23: #{tpu_custom_call.1} parent=11 // pred_region
          _
        $region24: #{tpu_custom_call.1} parent=11 // pred_fallthru
          _
        // Predicated region
        $region25: #{tpu_custom_call.1} parent=11 // pred_check
          %p245 = pneg %p133
        $region26: #{tpu_custom_call.1} parent=11 // pred_check_branch
          %247 = sbr.rel (%p245) target = $region28
        $region27: #{tpu_custom_call.1} parent=11 // pred_region
          %s249 = ssub.s32 16, 16
          %250 = vsyncadd [#allocation7], %s249
          %s252 = sshll.u32 %s4, 4
          %s253 = int_to_ptr.vmem [resolvable:$true] %s252
          %255 = dma.vmem_to_smem %s253, 16, [#allocation11], [#allocation7]
        $region28: #{tpu_custom_call.1} parent=11 // pred_fallthru
          _
        // Predicated region
        $region29: #{tpu_custom_call.1} parent=11 // pred_check
          %p256 = pneg %p154
        $region30: #{tpu_custom_call.1} parent=11 // pred_check_branch
          %258 = sbr.rel (%p256) target = $region32
        $region31: #{tpu_custom_call.1} parent=11 // pred_region
          %s260 = ssub.s32 16, 16
          %261 = vsyncadd [#allocation13], %s260
          %s263 = sshll.u32 %s5, 4
          %s264 = int_to_ptr.vmem [resolvable:$true] %s263
          %266 = dma.vmem_to_smem %s264, 16, [#allocation12], [#allocation13]
        $region32: #{tpu_custom_call.1} parent=11 // pred_fallthru
          _
        // Predicated region
        $region33: #{tpu_custom_call.1} parent=11 // pred_check
          %p267 = pneg %p175
        $region34: #{tpu_custom_call.1} parent=11 // pred_check_branch
          %269 = sbr.rel (%p267) target = $region36
        $region35: #{tpu_custom_call.1} parent=11 // pred_region
          _
        $region36: #{tpu_custom_call.1} parent=11 // pred_fallthru
          _
      $region12: #{tpu_custom_call.1} parent=5 // pred_fallthru
        _
      %p270 = scmp.lt.s32.totalorder %s23, 2
      // Predicated region
      $region37: #{tpu_custom_call.1} parent=5 // pred_check
        %p271 = pneg %p270
      $region38: #{tpu_custom_call.1} parent=5 // pred_check_branch
        %273 = sbr.rel (%p271) target = $region40
      $region39: #{tpu_custom_call.1} parent=5 // pred_region
        // Predicated region
        $region41: #{tpu_custom_call.1} parent=39 // pred_check
          %p274 = pneg %p43
        $region42: #{tpu_custom_call.1} parent=39 // pred_check_branch
          %276 = sbr.rel (%p274) target = $region44
        $region43: #{tpu_custom_call.1} parent=39 // pred_region
          %s277 = sand.u32 %s33, 1
          %s278 = scalar_lea.sflag [#allocation5], %s277
          %s279 = sand.u32 %s33, 1
          %s280 = smul.addr %s279, 8
          %s281 = scalar_lea.vmem [#allocation4], %s280
          %s282 = smul.u32 2, %s23
          %s284 = ssub.s32 128, 128
          %285 = vsyncadd %s278, %s284
          %s286 = smul.addr %s282, 64
          %s287 = scalar_lea.hbm %s0, %s286
          %s289 = sshll.u32 %s281, 4
          %s290 = int_to_ptr.vmem [resolvable:$true] %s289
          %292 = dma.hbm_to_vmem [thread:$0]  %s287, 128, %s290, %s278
        $region44: #{tpu_custom_call.1} parent=39 // pred_fallthru
          _
      $region40: #{tpu_custom_call.1} parent=5 // pred_fallthru
        _
      %p293 = scmp.le.s32.totalorder 1, %s23
      %p294 = scmp.lt.s32.totalorder %s23, 3
      %p295 = pnand %p293, %p294
      %p296 = pneg %p295
      // Predicated region
      $region45: #{tpu_custom_call.1} parent=5 // pred_check
        _
      $region46: #{tpu_custom_call.1} parent=5 // pred_check_branch
        %298 = sbr.rel (%p295) target = $region48
      $region47: #{tpu_custom_call.1} parent=5 // pred_region
        %s299 = ssub.s32 %s23, 1
        %s300 = sand.u32 %s36, 1
        %s301 = scalar_lea.sflag [#allocation5], %s300
        %s302 = sand.u32 %s36, 1
        %s303 = smul.addr %s302, 8
        %s304 = scalar_lea.vmem [#allocation4], %s303
        // Predicated region
        $region49: #{tpu_custom_call.1} parent=47 // pred_check
          %p305 = pneg %p49
        $region50: #{tpu_custom_call.1} parent=47 // pred_check_branch
          %307 = sbr.rel (%p305) target = $region52
        $region51: #{tpu_custom_call.1} parent=47 // pred_region
          %308 = dma.done %s301, 128
        $region52: #{tpu_custom_call.1} parent=47 // pred_fallthru
          _
        // Predicated region
        $region53: #{tpu_custom_call.1} parent=47 // pred_check
          %p309 = pneg %p70
        $region54: #{tpu_custom_call.1} parent=47 // pred_check_branch
          %311 = sbr.rel (%p309) target = $region56
        $region55: #{tpu_custom_call.1} parent=47 // pred_region
          %312 = dma.done [#allocation9], 768
        $region56: #{tpu_custom_call.1} parent=47 // pred_fallthru
          _
        // Predicated region
        $region57: #{tpu_custom_call.1} parent=47 // pred_check
          %p313 = pneg %p91
        $region58: #{tpu_custom_call.1} parent=47 // pred_check_branch
          %315 = sbr.rel (%p313) target = $region60
        $region59: #{tpu_custom_call.1} parent=47 // pred_region
          %316 = dma.done [#allocation9], 3328
        $region60: #{tpu_custom_call.1} parent=47 // pred_fallthru
          _
        // Predicated region
        $region61: #{tpu_custom_call.1} parent=47 // pred_check
          %p317 = pneg %p133
        $region62: #{tpu_custom_call.1} parent=47 // pred_check_branch
          %319 = sbr.rel (%p317) target = $region64
        $region63: #{tpu_custom_call.1} parent=47 // pred_region
          %320 = dma.done [#allocation7], 16
        $region64: #{tpu_custom_call.1} parent=47 // pred_fallthru
          _
        // Predicated region
        $region65: #{tpu_custom_call.1} parent=47 // pred_check
          %p321 = pneg %p154
        $region66: #{tpu_custom_call.1} parent=47 // pred_check_branch
          %323 = sbr.rel (%p321) target = $region68
        $region67: #{tpu_custom_call.1} parent=47 // pred_region
          %324 = dma.done [#allocation13], 16
        $region68: #{tpu_custom_call.1} parent=47 // pred_fallthru
          _
        %325 = sfence
        %s326 = sand.u32 %s36, 1
        %s327 = scalar_lea.sflag [#allocation5], %s326
        %s328 = sand.u32 %s36, 1
        %s329 = smul.addr %s328, 8
        %s330 = scalar_lea.vmem [#allocation4], %s329
        %p331 = pneg %p49
        %p332 = pneg %p46
        %p333 = pneg %p70
        %p334 = pneg %p67
        %p335 = pneg %p91
        %p336 = pneg %p88
        %p337 = pneg %p112
        %p338 = pneg %p109
        %p339 = pneg %p133
        %p340 = pneg %p130
        %p341 = pneg %p154
        %p342 = pneg %p151
        %p343 = pneg %p175
        %p344 = pneg %p172
        %p345 = pneg %p201
        %p346 = pneg %p198
        %s347 = sand.u32 %s188, 1
        %s348 = scalar_lea.sflag [#allocation6], %s347
        %s349 = sand.u32 %s188, 1
        %s350 = smul.addr %s349, 8
        %s351 = scalar_lea.vmem [#allocation14], %s350
        %s352 = smul.u32 2, %s28
        %s353 = smul.u32 2, %s28
        %v354 = vld [vmem:[%s304] sm:$0xff]
        %v356 = vcombine.high %v354, %v354
        %vm358 = vcmask 1043456
        %v359 = vsel %vm358, %v354, 0.0
        %v360 = vsel %vm358, %v356, 0.0
        %v361 = vadd.f32 %v359, %v360
        %362 = vadd.xlane.f32.xlu0 %v361
        %v363 = vpop.xlane.xlu0 %362
        %v364 = vrcp.pop 256.0
        %v365 = vmul.f32 %v363, %v364
        %s366 = sld [smem:[#allocation3]]
        %v367 = vstv %s366
        %v368 = vmul.f32 %v367, %v365
        %v369 = vadd.f32 %v368, 0.0
        %v370 = vxor.u32 %v369, 2147483648
        %v371 = vmul.f32 %v370, 1.442695
        %v372 = vpow.pop %v371
        %v373 = vadd.f32 %v372, 1.0
        %v374 = vrcp.pop %v373
        %v375 = vmul.f32 1.0, %v374
        %v378 = vunpack.c.l.s4 839922192
        %v379 = vunpack.c.0.s8 %v378
        %v380 = vlaneseq
        %v381 = vshrl.u32 %v380, 7
        %v382 = vsub.s32 %v379, %v381
        %v383 = vrot.slane %v375, %v382
        %v385 = vmul.f32 %v354, %v383
        %v387 = vrot.slane %v385, 5
        %v388 = vrot.slane %v387, 4
        %v390 = vadd.f32 %v385, %v388
        %v391 = vmax.f32 %v385, %v388
        %v392 = vrot.slane %v385, 6
        %v393 = vrot.slane %v392, 4
        %v395 = vadd.f32 %v390, %v393
        %v396 = vmax.f32 %v391, %v393
        %v397 = vrot.slane %v385, 7
        %v398 = vrot.slane %v397, 4
        %v400 = vadd.f32 %v395, %v398
        %v401 = vmax.f32 %v396, %v398
        %v402 = vmul.f32 %v400, 0.25
        %v404 = vlaneseq
        %v405 = vshrl.u32 %v404, 7
        %v406 = vsub.s32 0, %v405
        %v407 = vrot.slane %v402, %v406
        %v408 = vlaneseq
        %v409 = vshrl.u32 %v408, 7
        %v410 = vsub.s32 4, %v409
        %v411 = vrot.slane %v402, %v410
        %v415 = vlaneseq
        %v416 = vshrl.u32 %v415, 7
        %v417 = vsub.s32 0, %v416
        %v418 = vrot.slane %v401, %v417
        %v419 = vlaneseq
        %v420 = vshrl.u32 %v419, 7
        %v421 = vsub.s32 4, %v420
        %v422 = vrot.slane %v401, %v421
        %vm425 = vcmask 1040384
        %v426 = vsel %vm425, %v407, %v418
        %v427 = vsel %vm425, %v411, %v422
        %430 = vrot.lane.b32.xlu0 %v427, 51
        %v431 = vpop.permute.xlu0 %430
        %432 = vrot.lane.b32.xlu0 %v426, 51
        %v433 = vpop.permute.xlu0 %432
        %vm434 = vcmask 416768
        %v435 = vsel %vm434, %v431, %v433
        %v436 = vsel %vm434, %v433, %v431
        %439 = vst [vmem:[#allocation2] sm:$0x3] %v435
        %440 = vst [vmem:[#allocation2 + $0x8] sm:$0x3] %v436
        %v441 = vrot.slane %v427, 6
        %v442 = vrot.slane %v426, 6
        %443 = vrot.lane.b32.xlu0 %v441, 50
        %v444 = vpop.permute.xlu0 %443
        %445 = vrot.lane.b32.xlu0 %v442, 50
        %v446 = vpop.permute.xlu0 %445
        %vm447 = vcmask 408576
        %v448 = vsel %vm447, %v444, %v446
        %v449 = vsel %vm447, %v446, %v444
        %452 = vst [vmem:[#allocation2] sm:$0xc] %v448
        %453 = vst [vmem:[#allocation2 + $0x8] sm:$0xc] %v449
        %v454 = vrot.slane %v427, 4
        %v455 = vrot.slane %v426, 4
        %456 = vrot.lane.b32.xlu0 %v454, 49
        %v457 = vpop.permute.xlu0 %456
        %458 = vrot.lane.b32.xlu0 %v455, 49
        %v459 = vpop.permute.xlu0 %458
        %vm460 = vcmask 400384
        %v461 = vsel %vm460, %v457, %v459
        %v462 = vsel %vm460, %v459, %v457
        %465 = vst [vmem:[#allocation2] sm:$0x30] %v461
        %466 = vst [vmem:[#allocation2 + $0x8] sm:$0x30] %v462
        %v467 = vrot.slane %v427, 2
        %v468 = vrot.slane %v426, 2
        %469 = vrot.lane.b32.xlu0 %v467, 48
        %v470 = vpop.permute.xlu0 %469
        %471 = vrot.lane.b32.xlu0 %v468, 48
        %v472 = vpop.permute.xlu0 %471
        %vm473 = vcmask 392192
        %v474 = vsel %vm473, %v470, %v472
        %v475 = vsel %vm473, %v472, %v470
        %478 = vst [vmem:[#allocation2] sm:$0xc0] %v474
        %479 = vst [vmem:[#allocation2 + $0x8] sm:$0xc0] %v475
        %480 = vrot.lane.b32.xlu0 %v427, 47
        %v481 = vpop.permute.xlu0 %480
        %482 = vrot.lane.b32.xlu0 %v426, 47
        %v483 = vpop.permute.xlu0 %482
        %vm484 = vcmask 384000
        %v485 = vsel %vm484, %v481, %v483
        %v486 = vsel %vm484, %v483, %v481
        %489 = vst [vmem:[#allocation2 + $0x10] sm:$0x3] %v485
        %490 = vst [vmem:[#allocation2 + $0x18] sm:$0x3] %v486
        %491 = vrot.lane.b32.xlu0 %v441, 46
        %v492 = vpop.permute.xlu0 %491
        %493 = vrot.lane.b32.xlu0 %v442, 46
        %v494 = vpop.permute.xlu0 %493
        %vm495 = vcmask 375808
        %v496 = vsel %vm495, %v492, %v494
        %v497 = vsel %vm495, %v494, %v492
        %500 = vst [vmem:[#allocation2 + $0x10] sm:$0xc] %v496
        %501 = vst [vmem:[#allocation2 + $0x18] sm:$0xc] %v497
        %502 = vrot.lane.b32.xlu0 %v454, 45
        %v503 = vpop.permute.xlu0 %502
        %504 = vrot.lane.b32.xlu0 %v455, 45
        %v505 = vpop.permute.xlu0 %504
        %vm506 = vcmask 367616
        %v507 = vsel %vm506, %v503, %v505
        %v508 = vsel %vm506, %v505, %v503
        %511 = vst [vmem:[#allocation2 + $0x10] sm:$0x30] %v507
        %512 = vst [vmem:[#allocation2 + $0x18] sm:$0x30] %v508
        %513 = vrot.lane.b32.xlu0 %v467, 35
        %v514 = vpop.permute.xlu0 %513
        %515 = vrot.lane.b32.xlu0 %v468, 35
        %v516 = vpop.permute.xlu0 %515
        %vm517 = vcmask 285696
        %v518 = vsel %vm517, %v514, %v516
        %v519 = vsel %vm517, %v516, %v514
        %522 = vst [vmem:[#allocation2 + $0x10] sm:$0xc0] %v518
        %523 = vst [vmem:[#allocation2 + $0x18] sm:$0xc0] %v519
        %524 = vrot.lane.b32.xlu0 %v427, 34
        %v525 = vpop.permute.xlu0 %524
        %526 = vrot.lane.b32.xlu0 %v426, 34
        %v527 = vpop.permute.xlu0 %526
        %vm528 = vcmask 277504
        %v529 = vsel %vm528, %v525, %v527
        %v530 = vsel %vm528, %v527, %v525
        %533 = vst [vmem:[#allocation2 + $0x20] sm:$0x3] %v529
        %534 = vst [vmem:[#allocation2 + $0x28] sm:$0x3] %v530
        %535 = vrot.lane.b32.xlu0 %v441, 33
        %v536 = vpop.permute.xlu0 %535
        %537 = vrot.lane.b32.xlu0 %v442, 33
        %v538 = vpop.permute.xlu0 %537
        %vm539 = vcmask 269312
        %v540 = vsel %vm539, %v536, %v538
        %v541 = vsel %vm539, %v538, %v536
        %544 = vst [vmem:[#allocation2 + $0x20] sm:$0xc] %v540
        %545 = vst [vmem:[#allocation2 + $0x28] sm:$0xc] %v541
        %546 = vrot.lane.b32.xlu0 %v454, 32
        %v547 = vpop.permute.xlu0 %546
        %548 = vrot.lane.b32.xlu0 %v455, 32
        %v549 = vpop.permute.xlu0 %548
        %vm550 = vcmask 261120
        %v551 = vsel %vm550, %v547, %v549
        %v552 = vsel %vm550, %v549, %v547
        %555 = vst [vmem:[#allocation2 + $0x20] sm:$0x30] %v551
        %556 = vst [vmem:[#allocation2 + $0x28] sm:$0x30] %v552
        %557 = vrot.lane.b32.xlu0 %v467, 31
        %v558 = vpop.permute.xlu0 %557
        %559 = vrot.lane.b32.xlu0 %v468, 31
        %v560 = vpop.permute.xlu0 %559
        %vm561 = vcmask 252928
        %v562 = vsel %vm561, %v558, %v560
        %v563 = vsel %vm561, %v560, %v558
        %566 = vst [vmem:[#allocation2 + $0x20] sm:$0xc0] %v562
        %567 = vst [vmem:[#allocation2 + $0x28] sm:$0xc0] %v563
        %568 = vrot.lane.b32.xlu0 %v427, 30
        %v569 = vpop.permute.xlu0 %568
        %570 = vrot.lane.b32.xlu0 %v426, 30
        %v571 = vpop.permute.xlu0 %570
        %vm572 = vcmask 244736
        %v573 = vsel %vm572, %v569, %v571
        %v574 = vsel %vm572, %v571, %v569
        %577 = vst [vmem:[#allocation2 + $0x30] sm:$0x3] %v573
        %578 = vst [vmem:[#allocation2 + $0x38] sm:$0x3] %v574
        %579 = vrot.lane.b32.xlu0 %v441, 29
        %v580 = vpop.permute.xlu0 %579
        %581 = vrot.lane.b32.xlu0 %v442, 29
        %v582 = vpop.permute.xlu0 %581
        %vm583 = vcmask 236544
        %v584 = vsel %vm583, %v580, %v582
        %v585 = vsel %vm583, %v582, %v580
        %588 = vst [vmem:[#allocation2 + $0x30] sm:$0xc] %v584
        %589 = vst [vmem:[#allocation2 + $0x38] sm:$0xc] %v585
        %590 = vrot.lane.b32.xlu0 %v454, 19
        %v591 = vpop.permute.xlu0 %590
        %592 = vrot.lane.b32.xlu0 %v455, 19
        %v593 = vpop.permute.xlu0 %592
        %vm594 = vcmask 154624
        %v595 = vsel %vm594, %v591, %v593
        %v596 = vsel %vm594, %v593, %v591
        %599 = vst [vmem:[#allocation2 + $0x30] sm:$0x30] %v595
        %600 = vst [vmem:[#allocation2 + $0x38] sm:$0x30] %v596
        %601 = vrot.lane.b32.xlu0 %v467, 18
        %v602 = vpop.permute.xlu0 %601
        %603 = vrot.lane.b32.xlu0 %v468, 18
        %v604 = vpop.permute.xlu0 %603
        %vm605 = vcmask 146432
        %v606 = vsel %vm605, %v602, %v604
        %v607 = vsel %vm605, %v604, %v602
        %610 = vst [vmem:[#allocation2 + $0x30] sm:$0xc0] %v606
        %611 = vst [vmem:[#allocation2 + $0x38] sm:$0xc0] %v607
        %612 = vrot.lane.b32.xlu0 %v427, 17
        %v613 = vpop.permute.xlu0 %612
        %614 = vrot.lane.b32.xlu0 %v426, 17
        %v615 = vpop.permute.xlu0 %614
        %vm616 = vcmask 138240
        %v617 = vsel %vm616, %v613, %v615
        %v618 = vsel %vm616, %v615, %v613
        %621 = vst [vmem:[#allocation2 + $0x40] sm:$0x3] %v617
        %622 = vst [vmem:[#allocation2 + $0x48] sm:$0x3] %v618
        %623 = vrot.lane.b32.xlu0 %v441, 16
        %v624 = vpop.permute.xlu0 %623
        %625 = vrot.lane.b32.xlu0 %v442, 16
        %v626 = vpop.permute.xlu0 %625
        %vm627 = vcmask 130048
        %v628 = vsel %vm627, %v624, %v626
        %v629 = vsel %vm627, %v626, %v624
        %632 = vst [vmem:[#allocation2 + $0x40] sm:$0xc] %v628
        %633 = vst [vmem:[#allocation2 + $0x48] sm:$0xc] %v629
        %634 = vrot.lane.b32.xlu0 %v454, 15
        %v635 = vpop.permute.xlu0 %634
        %636 = vrot.lane.b32.xlu0 %v455, 15
        %v637 = vpop.permute.xlu0 %636
        %vm638 = vcmask 121856
        %v639 = vsel %vm638, %v635, %v637
        %v640 = vsel %vm638, %v637, %v635
        %643 = vst [vmem:[#allocation2 + $0x40] sm:$0x30] %v639
        %644 = vst [vmem:[#allocation2 + $0x48] sm:$0x30] %v640
        %645 = vrot.lane.b32.xlu0 %v467, 14
        %v646 = vpop.permute.xlu0 %645
        %647 = vrot.lane.b32.xlu0 %v468, 14
        %v648 = vpop.permute.xlu0 %647
        %vm649 = vcmask 113664
        %v650 = vsel %vm649, %v646, %v648
        %v651 = vsel %vm649, %v648, %v646
        %654 = vst [vmem:[#allocation2 + $0x40] sm:$0xc0] %v650
        %655 = vst [vmem:[#allocation2 + $0x48] sm:$0xc0] %v651
        %656 = vrot.lane.b32.xlu0 %v427, 13
        %v657 = vpop.permute.xlu0 %656
        %658 = vrot.lane.b32.xlu0 %v426, 13
        %v659 = vpop.permute.xlu0 %658
        %vm660 = vcmask 105472
        %v661 = vsel %vm660, %v657, %v659
        %v662 = vsel %vm660, %v659, %v657
        %665 = vst [vmem:[#allocation2 + $0x50] sm:$0x3] %v661
        %666 = vst [vmem:[#allocation2 + $0x58] sm:$0x3] %v662
        %667 = vrot.lane.b32.xlu0 %v441, 3
        %v668 = vpop.permute.xlu0 %667
        %669 = vrot.lane.b32.xlu0 %v442, 3
        %v670 = vpop.permute.xlu0 %669
        %vm671 = vcmask 23552
        %v672 = vsel %vm671, %v668, %v670
        %v673 = vsel %vm671, %v670, %v668
        %676 = vst [vmem:[#allocation2 + $0x50] sm:$0xc] %v672
        %677 = vst [vmem:[#allocation2 + $0x58] sm:$0xc] %v673
        %678 = vrot.lane.b32.xlu0 %v454, 2
        %v679 = vpop.permute.xlu0 %678
        %680 = vrot.lane.b32.xlu0 %v455, 2
        %v681 = vpop.permute.xlu0 %680
        %vm682 = vcmask 15360
        %v683 = vsel %vm682, %v679, %v681
        %v684 = vsel %vm682, %v681, %v679
        %687 = vst [vmem:[#allocation2 + $0x50] sm:$0x30] %v683
        %688 = vst [vmem:[#allocation2 + $0x58] sm:$0x30] %v684
        %689 = vrot.lane.b32.xlu0 %v467, 1
        %v690 = vpop.permute.xlu0 %689
        %691 = vrot.lane.b32.xlu0 %v468, 1
        %v692 = vpop.permute.xlu0 %691
        %vm693 = vcmask 7168
        %v694 = vsel %vm693, %v690, %v692
        %v695 = vsel %vm693, %v692, %v690
        %698 = vst [vmem:[#allocation2 + $0x50] sm:$0xc0] %v694
        %699 = vst [vmem:[#allocation2 + $0x58] sm:$0xc0] %v695
        %700 = vst [vmem:[#allocation2 + $0x60] sm:$0x3] %v426
        %701 = vst [vmem:[#allocation2 + $0x68] sm:$0x3] %v427
        %702 = vrot.lane.b32.xlu0 %v442, 127
        %v703 = vpop.permute.xlu0 %702
        %704 = vrot.lane.b32.xlu0 %v441, 127
        %v705 = vpop.permute.xlu0 %704
        %vm706 = vcmask 1039360
        %v707 = vsel %vm706, %v703, %v705
        %v708 = vsel %vm706, %v705, %v703
        %711 = vst [vmem:[#allocation2 + $0x60] sm:$0xc] %v707
        %712 = vst [vmem:[#allocation2 + $0x68] sm:$0xc] %v708
        %713 = vrot.lane.b32.xlu0 %v455, 126
        %v714 = vpop.permute.xlu0 %713
        %715 = vrot.lane.b32.xlu0 %v454, 126
        %v716 = vpop.permute.xlu0 %715
        %vm717 = vcmask 1031168
        %v718 = vsel %vm717, %v714, %v716
        %v719 = vsel %vm717, %v716, %v714
        %722 = vst [vmem:[#allocation2 + $0x60] sm:$0x30] %v718
        %723 = vst [vmem:[#allocation2 + $0x68] sm:$0x30] %v719
        %724 = vrot.lane.b32.xlu0 %v468, 125
        %v725 = vpop.permute.xlu0 %724
        %726 = vrot.lane.b32.xlu0 %v467, 125
        %v727 = vpop.permute.xlu0 %726
        %vm728 = vcmask 1022976
        %v729 = vsel %vm728, %v725, %v727
        %v730 = vsel %vm728, %v727, %v725
        %733 = vst [vmem:[#allocation2 + $0x60] sm:$0xc0] %v729
        %734 = vst [vmem:[#allocation2 + $0x68] sm:$0xc0] %v730
        %735 = vrot.lane.b32.xlu0 %v426, 115
        %v736 = vpop.permute.xlu0 %735
        %737 = vrot.lane.b32.xlu0 %v427, 115
        %v738 = vpop.permute.xlu0 %737
        %vm739 = vcmask 941056
        %v740 = vsel %vm739, %v736, %v738
        %v741 = vsel %vm739, %v738, %v736
        %744 = vst [vmem:[#allocation2 + $0x70] sm:$0x3] %v740
        %745 = vst [vmem:[#allocation2 + $0x78] sm:$0x3] %v741
        %746 = vrot.lane.b32.xlu0 %v442, 114
        %v747 = vpop.permute.xlu0 %746
        %748 = vrot.lane.b32.xlu0 %v441, 114
        %v749 = vpop.permute.xlu0 %748
        %vm750 = vcmask 932864
        %v751 = vsel %vm750, %v747, %v749
        %v752 = vsel %vm750, %v749, %v747
        %755 = vst [vmem:[#allocation2 + $0x70] sm:$0xc] %v751
        %756 = vst [vmem:[#allocation2 + $0x78] sm:$0xc] %v752
        %757 = vrot.lane.b32.xlu0 %v455, 113
        %v758 = vpop.permute.xlu0 %757
        %759 = vrot.lane.b32.xlu0 %v454, 113
        %v760 = vpop.permute.xlu0 %759
        %vm761 = vcmask 924672
        %v762 = vsel %vm761, %v758, %v760
        %v763 = vsel %vm761, %v760, %v758
        %766 = vst [vmem:[#allocation2 + $0x70] sm:$0x30] %v762
        %767 = vst [vmem:[#allocation2 + $0x78] sm:$0x30] %v763
        %768 = vrot.lane.b32.xlu0 %v468, 112
        %v769 = vpop.permute.xlu0 %768
        %770 = vrot.lane.b32.xlu0 %v467, 112
        %v771 = vpop.permute.xlu0 %770
        %vm772 = vcmask 916480
        %v773 = vsel %vm772, %v769, %v771
        %v774 = vsel %vm772, %v771, %v769
        %777 = vst [vmem:[#allocation2 + $0x70] sm:$0xc0] %v773
        %778 = vst [vmem:[#allocation2 + $0x78] sm:$0xc0] %v774
        %779 = vrot.lane.b32.xlu0 %v426, 111
        %v780 = vpop.permute.xlu0 %779
        %781 = vrot.lane.b32.xlu0 %v427, 111
        %v782 = vpop.permute.xlu0 %781
        %vm783 = vcmask 908288
        %v784 = vsel %vm783, %v780, %v782
        %v785 = vsel %vm783, %v782, %v780
        %788 = vst [vmem:[#allocation2 + $0x80] sm:$0x3] %v784
        %789 = vst [vmem:[#allocation2 + $0x88] sm:$0x3] %v785
        %790 = vrot.lane.b32.xlu0 %v442, 110
        %v791 = vpop.permute.xlu0 %790
        %792 = vrot.lane.b32.xlu0 %v441, 110
        %v793 = vpop.permute.xlu0 %792
        %vm794 = vcmask 900096
        %v795 = vsel %vm794, %v791, %v793
        %v796 = vsel %vm794, %v793, %v791
        %799 = vst [vmem:[#allocation2 + $0x80] sm:$0xc] %v795
        %800 = vst [vmem:[#allocation2 + $0x88] sm:$0xc] %v796
        %801 = vrot.lane.b32.xlu0 %v455, 109
        %v802 = vpop.permute.xlu0 %801
        %803 = vrot.lane.b32.xlu0 %v454, 109
        %v804 = vpop.permute.xlu0 %803
        %vm805 = vcmask 891904
        %v806 = vsel %vm805, %v802, %v804
        %v807 = vsel %vm805, %v804, %v802
        %810 = vst [vmem:[#allocation2 + $0x80] sm:$0x30] %v806
        %811 = vst [vmem:[#allocation2 + $0x88] sm:$0x30] %v807
        %812 = vrot.lane.b32.xlu0 %v468, 99
        %v813 = vpop.permute.xlu0 %812
        %814 = vrot.lane.b32.xlu0 %v467, 99
        %v815 = vpop.permute.xlu0 %814
        %vm816 = vcmask 809984
        %v817 = vsel %vm816, %v813, %v815
        %v818 = vsel %vm816, %v815, %v813
        %821 = vst [vmem:[#allocation2 + $0x80] sm:$0xc0] %v817
        %822 = vst [vmem:[#allocation2 + $0x88] sm:$0xc0] %v818
        %823 = vrot.lane.b32.xlu0 %v426, 98
        %v824 = vpop.permute.xlu0 %823
        %825 = vrot.lane.b32.xlu0 %v427, 98
        %v826 = vpop.permute.xlu0 %825
        %vm827 = vcmask 801792
        %v828 = vsel %vm827, %v824, %v826
        %v829 = vsel %vm827, %v826, %v824
        %832 = vst [vmem:[#allocation2 + $0x90] sm:$0x3] %v828
        %833 = vst [vmem:[#allocation2 + $0x98] sm:$0x3] %v829
        %834 = vrot.lane.b32.xlu0 %v442, 97
        %v835 = vpop.permute.xlu0 %834
        %836 = vrot.lane.b32.xlu0 %v441, 97
        %v837 = vpop.permute.xlu0 %836
        %vm838 = vcmask 793600
        %v839 = vsel %vm838, %v835, %v837
        %v840 = vsel %vm838, %v837, %v835
        %843 = vst [vmem:[#allocation2 + $0x90] sm:$0xc] %v839
        %844 = vst [vmem:[#allocation2 + $0x98] sm:$0xc] %v840
        %845 = vrot.lane.b32.xlu0 %v455, 96
        %v846 = vpop.permute.xlu0 %845
        %847 = vrot.lane.b32.xlu0 %v454, 96
        %v848 = vpop.permute.xlu0 %847
        %vm849 = vcmask 785408
        %v850 = vsel %vm849, %v846, %v848
        %v851 = vsel %vm849, %v848, %v846
        %854 = vst [vmem:[#allocation2 + $0x90] sm:$0x30] %v850
        %855 = vst [vmem:[#allocation2 + $0x98] sm:$0x30] %v851
        %856 = vrot.lane.b32.xlu0 %v468, 95
        %v857 = vpop.permute.xlu0 %856
        %858 = vrot.lane.b32.xlu0 %v467, 95
        %v859 = vpop.permute.xlu0 %858
        %vm860 = vcmask 777216
        %v861 = vsel %vm860, %v857, %v859
        %v862 = vsel %vm860, %v859, %v857
        %865 = vst [vmem:[#allocation2 + $0x90] sm:$0xc0] %v861
        %866 = vst [vmem:[#allocation2 + $0x98] sm:$0xc0] %v862
        %867 = vrot.lane.b32.xlu0 %v426, 94
        %v868 = vpop.permute.xlu0 %867
        %869 = vrot.lane.b32.xlu0 %v427, 94
        %v870 = vpop.permute.xlu0 %869
        %vm871 = vcmask 769024
        %v872 = vsel %vm871, %v868, %v870
        %v873 = vsel %vm871, %v870, %v868
        %876 = vst [vmem:[#allocation2 + $0xa0] sm:$0x3] %v872
        %877 = vst [vmem:[#allocation2 + $0xa8] sm:$0x3] %v873
        %878 = vrot.lane.b32.xlu0 %v442, 93
        %v879 = vpop.permute.xlu0 %878
        %880 = vrot.lane.b32.xlu0 %v441, 93
        %v881 = vpop.permute.xlu0 %880
        %vm882 = vcmask 760832
        %v883 = vsel %vm882, %v879, %v881
        %v884 = vsel %vm882, %v881, %v879
        %887 = vst [vmem:[#allocation2 + $0xa0] sm:$0xc] %v883
        %888 = vst [vmem:[#allocation2 + $0xa8] sm:$0xc] %v884
        %889 = vrot.lane.b32.xlu0 %v455, 83
        %v890 = vpop.permute.xlu0 %889
        %891 = vrot.lane.b32.xlu0 %v454, 83
        %v892 = vpop.permute.xlu0 %891
        %vm893 = vcmask 678912
        %v894 = vsel %vm893, %v890, %v892
        %v895 = vsel %vm893, %v892, %v890
        %898 = vst [vmem:[#allocation2 + $0xa0] sm:$0x30] %v894
        %899 = vst [vmem:[#allocation2 + $0xa8] sm:$0x30] %v895
        %900 = vrot.lane.b32.xlu0 %v468, 82
        %v901 = vpop.permute.xlu0 %900
        %902 = vrot.lane.b32.xlu0 %v467, 82
        %v903 = vpop.permute.xlu0 %902
        %vm904 = vcmask 670720
        %v905 = vsel %vm904, %v901, %v903
        %v906 = vsel %vm904, %v903, %v901
        %909 = vst [vmem:[#allocation2 + $0xa0] sm:$0xc0] %v905
        %910 = vst [vmem:[#allocation2 + $0xa8] sm:$0xc0] %v906
        %911 = vrot.lane.b32.xlu0 %v426, 81
        %v912 = vpop.permute.xlu0 %911
        %913 = vrot.lane.b32.xlu0 %v427, 81
        %v914 = vpop.permute.xlu0 %913
        %vm915 = vcmask 662528
        %v916 = vsel %vm915, %v912, %v914
        %v917 = vsel %vm915, %v914, %v912
        %920 = vst [vmem:[#allocation2 + $0xb0] sm:$0x3] %v916
        %921 = vst [vmem:[#allocation2 + $0xb8] sm:$0x3] %v917
        %922 = vrot.lane.b32.xlu0 %v442, 80
        %v923 = vpop.permute.xlu0 %922
        %924 = vrot.lane.b32.xlu0 %v441, 80
        %v925 = vpop.permute.xlu0 %924
        %vm926 = vcmask 654336
        %v927 = vsel %vm926, %v923, %v925
        %v928 = vsel %vm926, %v925, %v923
        %931 = vst [vmem:[#allocation2 + $0xb0] sm:$0xc] %v927
        %932 = vst [vmem:[#allocation2 + $0xb8] sm:$0xc] %v928
        %933 = vrot.lane.b32.xlu0 %v455, 79
        %v934 = vpop.permute.xlu0 %933
        %935 = vrot.lane.b32.xlu0 %v454, 79
        %v936 = vpop.permute.xlu0 %935
        %vm937 = vcmask 646144
        %v938 = vsel %vm937, %v934, %v936
        %v939 = vsel %vm937, %v936, %v934
        %942 = vst [vmem:[#allocation2 + $0xb0] sm:$0x30] %v938
        %943 = vst [vmem:[#allocation2 + $0xb8] sm:$0x30] %v939
        %944 = vrot.lane.b32.xlu0 %v468, 78
        %v945 = vpop.permute.xlu0 %944
        %946 = vrot.lane.b32.xlu0 %v467, 78
        %v947 = vpop.permute.xlu0 %946
        %vm948 = vcmask 637952
        %v949 = vsel %vm948, %v945, %v947
        %v950 = vsel %vm948, %v947, %v945
        %953 = vst [vmem:[#allocation2 + $0xb0] sm:$0xc0] %v949
        %954 = vst [vmem:[#allocation2 + $0xb8] sm:$0xc0] %v950
        %955 = vrot.lane.b32.xlu0 %v426, 77
        %v956 = vpop.permute.xlu0 %955
        %957 = vrot.lane.b32.xlu0 %v427, 77
        %v958 = vpop.permute.xlu0 %957
        %vm959 = vcmask 629760
        %v960 = vsel %vm959, %v956, %v958
        %v961 = vsel %vm959, %v958, %v956
        %964 = vst [vmem:[#allocation2 + $0xc0] sm:$0x3] %v960
        %965 = vst [vmem:[#allocation2 + $0xc8] sm:$0x3] %v961
        %v966 = vlaneseq
        %vm967 = vcmp.ge.s32.totalorder %v966, 0
        %vm968 = vcmp.lt.s32.totalorder %v966, 256
        %vm969 = vmand %vm967, %vm968
        %s970 = scalar_lea.vmem [#allocation2], 194
        %971 = vst.msk [vmem:[%s970] ss:$8 sm:$0x3] %vm969, 1.0
        %972 = vst.msk [vmem:[%s970] ss:$8 sm:$0x0] %vm969, 1.0
        %v973 = vld [vmem:[#allocation2] sm:$0xff]
        %v974 = vld [vmem:[#allocation2 + $0x8] sm:$0xff]
        %v975 = vld [vmem:[#allocation2 + $0x10] sm:$0xff]
        %v976 = vld [vmem:[#allocation2 + $0x18] sm:$0xff]
        %v977 = vld [vmem:[#allocation2 + $0x20] sm:$0xff]
        %v978 = vld [vmem:[#allocation2 + $0x28] sm:$0xff]
        %v979 = vld [vmem:[#allocation2 + $0x30] sm:$0xff]
        %v980 = vld [vmem:[#allocation2 + $0x38] sm:$0xff]
        %v981 = vld [vmem:[#allocation2 + $0x40] sm:$0xff]
        %v982 = vld [vmem:[#allocation2 + $0x48] sm:$0xff]
        %v983 = vld [vmem:[#allocation2 + $0x50] sm:$0xff]
        %v984 = vld [vmem:[#allocation2 + $0x58] sm:$0xff]
        %v985 = vld [vmem:[#allocation2 + $0x60] sm:$0xff]
        %v986 = vld [vmem:[#allocation2 + $0x68] sm:$0xff]
        %v987 = vld [vmem:[#allocation2 + $0x70] sm:$0xff]
        %v988 = vld [vmem:[#allocation2 + $0x78] sm:$0xff]
        %v989 = vld [vmem:[#allocation2 + $0x80] sm:$0xff]
        %v990 = vld [vmem:[#allocation2 + $0x88] sm:$0xff]
        %v991 = vld [vmem:[#allocation2 + $0x90] sm:$0xff]
        %v992 = vld [vmem:[#allocation2 + $0x98] sm:$0xff]
        %v993 = vld [vmem:[#allocation2 + $0xa0] sm:$0xff]
        %v994 = vld [vmem:[#allocation2 + $0xa8] sm:$0xff]
        %v995 = vld [vmem:[#allocation2 + $0xb0] sm:$0xff]
        %v996 = vld [vmem:[#allocation2 + $0xb8] sm:$0xff]
        %v997 = vld [vmem:[#allocation2 + $0xc0] sm:$0x7]
        %v998 = vld [vmem:[#allocation2 + $0xc8] sm:$0x7]
        %v999 = vld [vmem:[#allocation10] sm:$0xff]
        %v1000 = vld [vmem:[#allocation10 + $0x8] sm:$0xff]
        %v1001 = vld [vmem:[#allocation10 + $0x10] sm:$0xff]
        %v1002 = vld [vmem:[#allocation10 + $0x18] sm:$0xff]
        %v1003 = vld [vmem:[#allocation10 + $0x20] sm:$0xff]
        %v1004 = vld [vmem:[#allocation10 + $0x28] sm:$0xff]
        %v1005 = vld [vmem:[#allocation10 + $0x30] sm:$0xff]
        %v1006 = vld [vmem:[#allocation10 + $0x38] sm:$0xff]
        %v1007 = vld [vmem:[#allocation10 + $0x40] sm:$0xff]
        %v1008 = vld [vmem:[#allocation10 + $0x48] sm:$0xff]
        %v1009 = vld [vmem:[#allocation10 + $0x50] sm:$0xff]
        %v1010 = vld [vmem:[#allocation10 + $0x58] sm:$0xff]
        %v1011 = vld [vmem:[#allocation10 + $0x60] sm:$0xff]
        %v1012 = vld [vmem:[#allocation10 + $0x68] sm:$0xff]
        %v1013 = vld [vmem:[#allocation10 + $0x70] sm:$0xff]
        %v1014 = vld [vmem:[#allocation10 + $0x78] sm:$0xff]
        %v1015 = vld [vmem:[#allocation10 + $0x80] sm:$0xff]
        %v1016 = vld [vmem:[#allocation10 + $0x88] sm:$0xff]
        %v1017 = vld [vmem:[#allocation10 + $0x90] sm:$0xff]
        %v1018 = vld [vmem:[#allocation10 + $0x98] sm:$0xff]
        %v1019 = vld [vmem:[#allocation10 + $0xa0] sm:$0xff]
        %v1020 = vld [vmem:[#allocation10 + $0xa8] sm:$0xff]
        %v1021 = vld [vmem:[#allocation10 + $0xb0] sm:$0xff]
        %v1022 = vld [vmem:[#allocation10 + $0xb8] sm:$0xff]
        %v1023 = vld [vmem:[#allocation10 + $0xc0] sm:$0x7]
        %v1024 = vld [vmem:[#allocation10 + $0xc8] sm:$0x7]
        %v1025 = vmul.f32 %v973, %v999
        %v1026 = vmul.f32 %v974, %v1000
        %v1027 = vmul.f32 %v975, %v1001
        %v1028 = vmul.f32 %v976, %v1002
        %v1029 = vmul.f32 %v977, %v1003
        %v1030 = vmul.f32 %v978, %v1004
        %v1031 = vmul.f32 %v979, %v1005
        %v1032 = vmul.f32 %v980, %v1006
        %v1033 = vmul.f32 %v981, %v1007
        %v1034 = vmul.f32 %v982, %v1008
        %v1035 = vmul.f32 %v983, %v1009
        %v1036 = vmul.f32 %v984, %v1010
        %v1037 = vmul.f32 %v985, %v1011
        %v1038 = vmul.f32 %v986, %v1012
        %v1039 = vmul.f32 %v987, %v1013
        %v1040 = vmul.f32 %v988, %v1014
        %v1041 = vmul.f32 %v989, %v1015
        %v1042 = vmul.f32 %v990, %v1016
        %v1043 = vmul.f32 %v991, %v1017
        %v1044 = vmul.f32 %v992, %v1018
        %v1045 = vmul.f32 %v993, %v1019
        %v1046 = vmul.f32 %v994, %v1020
        %v1047 = vmul.f32 %v995, %v1021
        %v1048 = vmul.f32 %v996, %v1022
        %v1049 = vmul.f32 %v997, %v1023
        %v1050 = vmul.f32 %v998, %v1024
        %v1051 = vld [vmem:[#allocation8] sm:$0xff]
        %v1052 = vld [vmem:[#allocation8 + $0x8] sm:$0xff]
        %v1053 = vld [vmem:[#allocation8 + $0x10] sm:$0xff]
        %v1054 = vld [vmem:[#allocation8 + $0x18] sm:$0xff]
        %v1055 = vld [vmem:[#allocation8 + $0x20] sm:$0xff]
        %v1056 = vld [vmem:[#allocation8 + $0x28] sm:$0xff]
        %v1058 = vsel %vm816, %v1051, 0
        %v1061 = vsel %vm816, %v1052, 0
        %v1064 = vsel %vm816, %v1053, 0
        %v1067 = vsel %vm816, %v1054, 0
        %v1070 = vsel %vm816, %v1055, 0
        %v1073 = vsel %vm816, %v1056, 0
        %vm1075 = vcmask 1042432
        %v1077 = vsel %vm1075, %v1049, 0
        %v1080 = vsel %vm1075, %v1050, 0
        %1082 = vmatprep.subr.mxu0 %v1026
        %1083 = vmatpush1.msra.mxu0 %v1025
        %1084 = vmatprep.subr.mxu0 %v1028
        %1085 = vmatpush1.msra.mxu0 %v1027
        %1086 = vmatprep.subr.mxu0 %v1030
        %1087 = vmatpush1.msra.mxu0 %v1029
        %1088 = vmatprep.subr.mxu0 %v1032
        %1089 = vmatpush1.msra.mxu0 %v1031
        %1090 = vmatprep.subr.mxu0 %v1034
        %1091 = vmatpush1.msra.mxu0 %v1033
        %1092 = vmatprep.subr.mxu0 %v1036
        %1093 = vmatpush1.msra.mxu0 %v1035
        %1094 = vmatprep.subr.mxu0 %v1038
        %1095 = vmatpush1.msra.mxu0 %v1037
        %1096 = vmatprep.subr.mxu0 %v1040
        %1097 = vmatpush1.msra.mxu0 %v1039
        %1098 = vmatprep.subr.mxu0 %v1042
        %1099 = vmatpush1.msra.mxu0 %v1041
        %1100 = vmatprep.subr.mxu0 %v1044
        %1101 = vmatpush1.msra.mxu0 %v1043
        %1102 = vmatprep.subr.mxu0 %v1046
        %1103 = vmatpush1.msra.mxu0 %v1045
        %1104 = vmatprep.subr.mxu0 %v1048
        %1105 = vmatpush1.msra.mxu0 %v1047
        %1106 = vmatprep.subr.mxu0 %v1080
        %1107 = vmatpush1.msra.mxu0 %v1077
        %1108 = vmatprep.subr.mxu0 0.0
        %1109 = vmatpush1.msra.mxu0 0.0
        %1110 = vmatprep.subr.mxu0 0.0
        %1111 = vmatpush1.msra.mxu0 0.0
        %1112 = vmatprep.subr.mxu0 0.0
        %1113 = vmatpush1.msra.mxu0 0.0
        %1114 = vmatprep.subr.mxu0 0.0
        %1115 = vmatpush1.msra.mxu0 0.0
        %1116 = vmatprep.subr.mxu0 0.0
        %1117 = vmatpush1.msra.mxu0 0.0
        %1118 = vmatprep.subr.mxu0 0.0
        %1119 = vmatpush1.msra.mxu0 0.0
        %1120 = vmatprep.subr.mxu0 0.0
        %1121 = vmatpush1.msra.mxu0 0.0
        %1122 = vmatprep.subr.mxu0 0.0
        %1123 = vmatpush1.msra.mxu0 0.0
        %1124 = vmatprep.subr.mxu0 0.0
        %1125 = vmatpush1.msra.mxu0 0.0
        %1126 = vmatprep.subr.mxu0 0.0
        %1127 = vmatpush1.msra.mxu0 0.0
        %1128 = vmatprep.subr.mxu0 0.0
        %1129 = vmatpush1.msra.mxu0 0.0
        %1130 = vmatprep.subr.mxu0 0.0
        %1131 = vmatpush1.msra.mxu0 0.0
        %1132 = vmatprep.subr.mxu0 0.0
        %1133 = vmatpush1.msra.mxu0 0.0
        %1134 = vmatprep.subr.mxu0 0.0
        %1135 = vmatpush1.msra.mxu0 0.0
        %1136 = vmatprep.subr.mxu0 0.0
        %1137 = vmatpush1.msra.mxu0 0.0
        %1138 = vmatprep.subr.mxu0 0.0
        %1139 = vmatpush1.msra.mxu0 0.0
        %1140 = vmatprep.subr.mxu0 0.0
        %1141 = vmatpush1.msra.mxu0 0.0
        %1142 = vmatprep.subr.mxu0 0.0
        %1143 = vmatpush1.msra.mxu0 0.0
        %1144 = vmatprep.subr.mxu0 0.0
        %1145 = vmatpush1.msra.mxu0 0.0
        %1146 = vmatprep.mubr.f32.mxu0 0.0
        %1147 = vmatmul.mubr.f32.gmra.mrb[0].mxu0 %v1058
        %v1148 = vpop.f32.mrb[0].mxu0
        %v1149 = vadd.f32 0.0, %v1148
        %v1150 = vpop.f32.mrb[0].mxu0
        %v1151 = vadd.f32 0.0, %v1150
        %1152 = vmatprep.mubr.f32.mxu0 0.0
        %1153 = vmatmul.mubr.f32.gmra.mrb[0].mxu0 %v1061
        %v1154 = vpop.f32.mrb[0].mxu0
        %v1155 = vadd.f32 0.0, %v1154
        %v1156 = vpop.f32.mrb[0].mxu0
        %v1157 = vadd.f32 0.0, %v1156
        %1158 = vmatprep.mubr.f32.mxu0 0.0
        %1159 = vmatmul.mubr.f32.gmra.mrb[0].mxu0 %v1064
        %v1160 = vpop.f32.mrb[0].mxu0
        %v1161 = vadd.f32 0.0, %v1160
        %v1162 = vpop.f32.mrb[0].mxu0
        %v1163 = vadd.f32 0.0, %v1162
        %1164 = vmatprep.mubr.f32.mxu0 0.0
        %1165 = vmatmul.mubr.f32.gmra.mrb[0].mxu0 %v1067
        %v1166 = vpop.f32.mrb[0].mxu0
        %v1167 = vadd.f32 0.0, %v1166
        %v1168 = vpop.f32.mrb[0].mxu0
        %v1169 = vadd.f32 0.0, %v1168
        %1170 = vmatprep.mubr.f32.mxu0 0.0
        %1171 = vmatmul.mubr.f32.gmra.mrb[0].mxu0 %v1070
        %v1172 = vpop.f32.mrb[0].mxu0
        %v1173 = vadd.f32 0.0, %v1172
        %v1174 = vpop.f32.mrb[0].mxu0
        %v1175 = vadd.f32 0.0, %v1174
        %1176 = vmatprep.mubr.f32.mxu0 0.0
        %1177 = vmatmul.mubr.f32.gmra.mrb[0].mxu0 %v1073
        %v1178 = vpop.f32.mrb[0].mxu0
        %v1179 = vadd.f32 0.0, %v1178
        %v1180 = vpop.f32.mrb[0].mxu0
        %v1181 = vadd.f32 0.0, %v1180
        %1182 = vdwg.mxu0
        %v1183 = vmax.f32 %v1149, 0.0
        %v1184 = vmax.f32 %v1151, 0.0
        %v1185 = vmax.f32 %v1155, 0.0
        %v1186 = vmax.f32 %v1157, 0.0
        %v1187 = vmax.f32 %v1161, 0.0
        %v1188 = vmax.f32 %v1163, 0.0
        %v1189 = vmax.f32 %v1167, 0.0
        %v1190 = vmax.f32 %v1169, 0.0
        %v1191 = vmax.f32 %v1173, 0.0
        %v1192 = vmax.f32 %v1175, 0.0
        %v1193 = vmax.f32 %v1179, 0.0
        %v1194 = vmax.f32 %v1181, 0.0
        %v1195 = vld [vmem:[%s3] sm:$0x7]
        %v1197 = vsel %vm473, %v1195, 0
        %1199 = vmatprep.subr.mxu0 %v1184
        %1200 = vmatpush1.msra.mxu0 %v1183
        %1201 = vmatprep.subr.mxu0 %v1186
        %1202 = vmatpush1.msra.mxu0 %v1185
        %1203 = vmatprep.subr.mxu0 %v1188
        %1204 = vmatpush1.msra.mxu0 %v1187
        %1205 = vmatprep.subr.mxu0 %v1190
        %1206 = vmatpush1.msra.mxu0 %v1189
        %1207 = vmatprep.subr.mxu0 %v1192
        %1208 = vmatpush1.msra.mxu0 %v1191
        %1209 = vmatprep.subr.mxu0 %v1194
        %1210 = vmatpush1.msra.mxu0 %v1193
        %1211 = vmatprep.subr.mxu0 0.0
        %1212 = vmatpush1.msra.mxu0 0.0
        %1213 = vmatprep.subr.mxu0 0.0
        %1214 = vmatpush1.msra.mxu0 0.0
        %1215 = vmatprep.subr.mxu0 0.0
        %1216 = vmatpush1.msra.mxu0 0.0
        %1217 = vmatprep.subr.mxu0 0.0
        %1218 = vmatpush1.msra.mxu0 0.0
        %1219 = vmatprep.subr.mxu0 0.0
        %1220 = vmatpush1.msra.mxu0 0.0
        %1221 = vmatprep.subr.mxu0 0.0
        %1222 = vmatpush1.msra.mxu0 0.0
        %1223 = vmatprep.subr.mxu0 0.0
        %1224 = vmatpush1.msra.mxu0 0.0
        %1225 = vmatprep.subr.mxu0 0.0
        %1226 = vmatpush1.msra.mxu0 0.0
        %1227 = vmatprep.subr.mxu0 0.0
        %1228 = vmatpush1.msra.mxu0 0.0
        %1229 = vmatprep.subr.mxu0 0.0
        %1230 = vmatpush1.msra.mxu0 0.0
        %1231 = vmatprep.subr.mxu0 0.0
        %1232 = vmatpush1.msra.mxu0 0.0
        %1233 = vmatprep.subr.mxu0 0.0
        %1234 = vmatpush1.msra.mxu0 0.0
        %1235 = vmatprep.subr.mxu0 0.0
        %1236 = vmatpush1.msra.mxu0 0.0
        %1237 = vmatprep.subr.mxu0 0.0
        %1238 = vmatpush1.msra.mxu0 0.0
        %1239 = vmatprep.subr.mxu0 0.0
        %1240 = vmatpush1.msra.mxu0 0.0
        %1241 = vmatprep.subr.mxu0 0.0
        %1242 = vmatpush1.msra.mxu0 0.0
        %1243 = vmatprep.subr.mxu0 0.0
        %1244 = vmatpush1.msra.mxu0 0.0
        %1245 = vmatprep.subr.mxu0 0.0
        %1246 = vmatpush1.msra.mxu0 0.0
        %1247 = vmatprep.subr.mxu0 0.0
        %1248 = vmatpush1.msra.mxu0 0.0
        %1249 = vmatprep.subr.mxu0 0.0
        %1250 = vmatpush1.msra.mxu0 0.0
        %1251 = vmatprep.subr.mxu0 0.0
        %1252 = vmatpush1.msra.mxu0 0.0
        %1253 = vmatprep.subr.mxu0 0.0
        %1254 = vmatpush1.msra.mxu0 0.0
        %1255 = vmatprep.subr.mxu0 0.0
        %1256 = vmatpush1.msra.mxu0 0.0
        %1257 = vmatprep.subr.mxu0 0.0
        %1258 = vmatpush1.msra.mxu0 0.0
        %1259 = vmatprep.subr.mxu0 0.0
        %1260 = vmatpush1.msra.mxu0 0.0
        %1261 = vmatprep.subr.mxu0 0.0
        %1262 = vmatpush1.msra.mxu0 0.0
        %1263 = vmatprep.mubr.f32.mxu0 0.0
        %1264 = vmatmul.mubr.f32.gmra.mrb[0].mxu0 %v1197
        %v1265 = vpop.f32.mrb[0].mxu0
        %v1266 = vadd.f32 0.0, %v1265
        %v1267 = vpop.f32.mrb[0].mxu0
        %v1268 = vadd.f32 0.0, %v1267
        %1269 = vdwg.mxu0
        %s1270 = sld [smem:[#allocation12]]
        %s1271 = sld [smem:[#allocation11]]
        %v1272 = vstv %s1271
        %v1273 = vadd.f32 %v1266, %v1272
        %v1274 = vadd.f32 %v1268, %v1272
        %v1275 = vxor.u32 %v1273, 2147483648
        %v1276 = vxor.u32 %v1274, 2147483648
        %v1277 = vmul.f32 %v1275, 1.442695
        %v1278 = vpow.pop %v1277
        %v1279 = vmul.f32 %v1276, 1.442695
        %v1280 = vpow.pop %v1279
        %v1281 = vadd.f32 %v1278, 1.0
        %v1282 = vadd.f32 %v1280, 1.0
        %v1283 = vrcp.pop %v1281
        %v1284 = vmul.f32 1.0, %v1283
        %v1285 = vrcp.pop %v1282
        %v1286 = vmul.f32 1.0, %v1285
        %v1287 = vstv %s1270
        %v1288 = vmul.f32 %v1287, %v1284
        %v1289 = vmul.f32 %v1287, %v1286
        %v1290 = vadd.f32 %v1288, 0.0
        %v1291 = vadd.f32 %v1289, 0.0
        %s1292 = sld [smem:[#allocation12 + $0x1]]
        %s1293 = sld [smem:[#allocation11 + $0x1]]
        %v1294 = vstv %s1293
        %v1295 = vadd.f32 %v1266, %v1294
        %v1296 = vadd.f32 %v1268, %v1294
        %v1297 = vxor.u32 %v1295, 2147483648
        %v1298 = vxor.u32 %v1296, 2147483648
        %v1299 = vmul.f32 %v1297, 1.442695
        %v1300 = vpow.pop %v1299
        %v1301 = vmul.f32 %v1298, 1.442695
        %v1302 = vpow.pop %v1301
        %v1303 = vadd.f32 %v1300, 1.0
        %v1304 = vadd.f32 %v1302, 1.0
        %v1305 = vrcp.pop %v1303
        %v1306 = vmul.f32 1.0, %v1305
        %v1307 = vrcp.pop %v1304
        %v1308 = vmul.f32 1.0, %v1307
        %v1309 = vstv %s1292
        %v1310 = vmul.f32 %v1309, %v1306
        %v1311 = vmul.f32 %v1309, %v1308
        %v1314 = vrot.slane %v1310, 1
        %v1315 = vrot.slane %v1311, 1
        %v1318 = vadd.f32 %v1290, %v1314
        %v1319 = vadd.f32 %v1291, %v1315
        %s1320 = sld [smem:[#allocation12 + $0x2]]
        %s1321 = sld [smem:[#allocation11 + $0x2]]
        %v1322 = vstv %s1321
        %v1323 = vadd.f32 %v1266, %v1322
        %v1324 = vadd.f32 %v1268, %v1322
        %v1325 = vxor.u32 %v1323, 2147483648
        %v1326 = vxor.u32 %v1324, 2147483648
        %v1327 = vmul.f32 %v1325, 1.442695
        %v1328 = vpow.pop %v1327
        %v1329 = vmul.f32 %v1326, 1.442695
        %v1330 = vpow.pop %v1329
        %v1331 = vadd.f32 %v1328, 1.0
        %v1332 = vadd.f32 %v1330, 1.0
        %v1333 = vrcp.pop %v1331
        %v1334 = vmul.f32 1.0, %v1333
        %v1335 = vrcp.pop %v1332
        %v1336 = vmul.f32 1.0, %v1335
        %v1337 = vstv %s1320
        %v1338 = vmul.f32 %v1337, %v1334
        %v1339 = vmul.f32 %v1337, %v1336
        %v1342 = vrot.slane %v1338, 2
        %v1343 = vrot.slane %v1339, 2
        %v1346 = vadd.f32 %v1318, %v1342
        %v1347 = vadd.f32 %v1319, %v1343
        %v1348 = vadd.f32 %v1346, 1.0
        %v1349 = vadd.f32 %v1347, 1.0
        %v1350 = vlaneseq
        %v1351 = vshrl.u32 %v1350, 7
        %v1352 = vsub.s32 0, %v1351
        %v1353 = vrot.slane %v1348, %v1352
        %v1354 = vlaneseq
        %v1355 = vshrl.u32 %v1354, 7
        %v1356 = vsub.s32 0, %v1355
        %v1357 = vrot.slane %v1349, %v1356
        %v1360 = vcombine.low %v1353, %v1357
        %v1362 = vmul.f32 %v385, %v1360
        %1363 = vst [vmem:[%s351] sm:$0xff] %v1362
        %s1364 = sand.u32 %s188, 1
        %s1365 = scalar_lea.sflag [#allocation6], %s1364
        %s1366 = sand.u32 %s188, 1
        %s1367 = smul.addr %s1366, 8
        %s1368 = scalar_lea.vmem [#allocation14], %s1367
        // Predicated region
        $region69: #{tpu_custom_call.1} parent=47 // pred_check
          %p1369 = pneg %p198
        $region70: #{tpu_custom_call.1} parent=47 // pred_check_branch
          %1371 = sbr.rel (%p1369) target = $region72
        $region71: #{tpu_custom_call.1} parent=47 // pred_region
          %s1372 = smul.u32 2, %s28
          %s1374 = ssub.s32 128, 128
          %1375 = vsyncadd %s1365, %s1374
          %s1376 = smul.addr %s1372, 64
          %s1377 = scalar_lea.hbm %s7, %s1376
          %s1379 = sshll.u32 %s1368, 4
          %s1380 = int_to_ptr.vmem [resolvable:$true] %s1379
          %1382 = dma.vmem_to_hbm [thread:$0]  %s1380, 128, %s1377, %s1365
        $region72: #{tpu_custom_call.1} parent=47 // pred_fallthru
          _
      $region48: #{tpu_custom_call.1} parent=5 // pred_fallthru
        _
      %p1383 = scmp.le.s32.totalorder 2, %s23
      // Predicated region
      $region73: #{tpu_custom_call.1} parent=5 // pred_check
        %p1384 = pneg %p1383
      $region74: #{tpu_custom_call.1} parent=5 // pred_check_branch
        %1386 = sbr.rel (%p1384) target = $region76
      $region75: #{tpu_custom_call.1} parent=5 // pred_region
        %s1387 = ssub.s32 %s23, 2
        // Predicated region
        $region77: #{tpu_custom_call.1} parent=75 // pred_check
          %p1388 = pneg %p204
        $region78: #{tpu_custom_call.1} parent=75 // pred_check_branch
          %1390 = sbr.rel (%p1388) target = $region80
        $region79: #{tpu_custom_call.1} parent=75 // pred_region
          %s1391 = sand.u32 %s189, 1
          %s1392 = scalar_lea.sflag [#allocation6], %s1391
          %s1393 = sand.u32 %s189, 1
          %s1394 = smul.addr %s1393, 8
          %s1395 = scalar_lea.vmem [#allocation14], %s1394
          %1396 = dma.done %s1392, 128
        $region80: #{tpu_custom_call.1} parent=75 // pred_fallthru
          _
      $region76: #{tpu_custom_call.1} parent=5 // pred_fallthru
        _
    $region6: #{tpu_custom_call.1} parent=1 // loop_footer
      %s27 = sadd.s32 1, %s23
    $region7: #{tpu_custom_call.1} parent=1 // loop_footer_branch
      %22 = sbr.rel target = $region3
    $region8: #{tpu_custom_call.1} parent=1 // loop_exit
      _
    %1397 = vsyncpa [#allocation5], 1
    %s1398 = scalar_lea.sflag [#allocation5], 1
    %1399 = vsyncpa %s1398, 1
    %1400 = vsyncpa [#allocation9], 1
    %1401 = vsyncpa [#allocation6], 1
    %s1402 = scalar_lea.sflag [#allocation6], 1
    %1403 = vsyncpa %s1402, 1
    %1404 = vsyncpa [#allocation7], 1
    %s1405 = scalar_lea.sflag [#allocation7], 1
    %1406 = vsyncpa %s1405, 1
    %1407 = vsyncpa [#allocation13], 1

</llo_original>
